<compile_context>
chip_gen: v6e
topology: v6e:2x2x1
jax: 0.10.0
libtpu: 0.0.40
codegen_flags: <defaults>
</compile_context>

<pallas_src>
import functools

import jax
import jax.numpy as jnp
from jax import lax
from jax.experimental import pallas as pl
from jax.experimental.pallas import tpu as pltpu

KH = KW = 3      # 3x3 conv, padding=1
LANES = 128      # TPU lane width


def _tom_kernel(w_ref, b_ref, px_ref, wc_ref, pr_ref, mc_ref, *, H, W):
    """One grid step == one batch tile of `bt` images.

    w_ref  : (KH*KW*Cin*Cout,) f32, SMEM, flattened HWIO order
    b_ref  : (Cout,)           f32, SMEM
    px_ref : (bt, Cin,  R, 128) person, channel planes flattened row-major
    wc_ref : (bt, Rm, 128)      warped cloth, fully flattened (lane-dense)
    pr_ref : (bt, Cout, R, 128) output: p_rendered (flattened planes)
    mc_ref : (bt, Rm, 128)      output: m_composite = sigmoid(warped cloth)
    """
    bt, c_in, R, _ = px_ref.shape
    c_out = pr_ref.shape[1]

    # ---- Static per-tap shift plans + border masks (built once per trace) ---
    # Flat index i = 128*r + l maps to pixel (h, w) = (i // W, i % W).
    row_i = lax.broadcasted_iota(jnp.int32, (R, LANES), 0)
    lane_i = lax.broadcasted_iota(jnp.int32, (R, LANES), 1)
    flat_i = row_i * LANES + lane_i
    if W & (W - 1) == 0:                       # power-of-two width: shift/and
        hh = flat_i >> (W.bit_length() - 1)
        ww = flat_i & (W - 1)
    else:
        hh = flat_i // W
        ww = flat_i % W

    taps = []
    for kh in range(KH):
        for kw in range(KW):
            dh, dw = kh - 1, kw - 1
            s = dh * W + dw                    # flat shift for this tap
            sm, sd = s % LANES, s // LANES     # lane / row components of s
            lane_shift = (-sm) % LANES         # pltpu.roll amount (lane axis)
            row_lo = (-sd) % R                 # row stitch: no lane carry
            row_hi = (-(sd + 1)) % R           # row stitch: with lane carry
            valid = ((hh + dh >= 0) & (hh + dh < H) &
                     (ww + dw >= 0) & (ww + dw < W))
            use_lo = (lane_i + sm) < LANES     # which stitch half per lane
            taps.append((kh, kw, dh, dw, sm, lane_shift, row_lo, row_hi,
                         valid, use_lo))

    # ---- Direct 3x3 conv: lane-dense VPU FMAs + XLU rolls, no MXU ----------
    for bi in range(bt):
        planes = [px_ref[bi, ci].astype(jnp.float32) for ci in range(c_in)]
        accs = [jnp.full((R, LANES), b_ref[co], dtype=jnp.float32)
                for co in range(c_out)]
        for (kh, kw, dh, dw, sm, lane_shift, row_lo, row_hi,
             valid, use_lo) in taps:
            base = (kh * KW + kw) * c_in
            for ci in range(c_in):
                p = planes[ci]
                if dh == 0 and dw == 0:
                    tap = p                                   # centre tap
                else:
                    a = (pltpu.roll(p, shift=lane_shift, axis=1)
                         if lane_shift else p)
                    lo = jnp.roll(a, row_lo, axis=0) if row_lo else a
                    if sm == 0:
                        stitched = lo
                    else:
                        hi = jnp.roll(a, row_hi, axis=0) if row_hi else a
                        stitched = jnp.where(use_lo, lo, hi)
                    tap = jnp.where(valid, stitched, 0.0)
                widx = (base + ci) * c_out
                for co in range(c_out):
                    accs[co] = accs[co] + tap * w_ref[widx + co]
        for co in range(c_out):
            pr_ref[bi, co] = accs[co].astype(pr_ref.dtype)

    # ---- m_composite = sigmoid(warped_cloth): EUP tanh formulation ---------
    wc = wc_ref[...].astype(jnp.float32)
    mc_ref[...] = (0.5 * jnp.tanh(0.5 * wc) + 0.5).astype(mc_ref.dtype)


def tom_forward(person_nchw, warped_cloth_nchw, weight_oihw, bias):
    """TOM.forward: returns (p_rendered, m_composite), both NCHW."""
    B, C, H, W = person_nchw.shape
    c_out, c_in = weight_oihw.shape[0], weight_oihw.shape[1]
    assert C == c_in
    assert (H * W) % LANES == 0, "H*W must be a multiple of 128"
    R = (H * W) // LANES
    Rm = (C * H * W) // LANES

    # Batch folding: at most 2 grid steps (both v7x TCs busy; negligible extra
    # cost on single-core v5e/v6e).  Odd / size-1 batches run as one step.
    bt = B // 2 if (B >= 2 and B % 2 == 0) else B
    nsteps = B // bt

    # Tiny parameter repack (81 + 3 floats) into flat SMEM-friendly arrays.
    w_flat = jnp.transpose(weight_oihw, (2, 3, 1, 0)).reshape(-1)  # HWIO flat
    b_flat = bias.reshape(-1)

    # Free, contiguous reshapes into lane-dense (.., 128) slabs.
    person_p = person_nchw.reshape(B, C, R, LANES)
    cloth_p = warped_cloth_nchw.reshape(B, Rm, LANES)

    kernel = functools.partial(_tom_kernel, H=H, W=W)

    p_r, m_c = pl.pallas_call(
        kernel,
        out_shape=(
            jax.ShapeDtypeStruct((B, c_out, R, LANES), person_nchw.dtype),
            jax.ShapeDtypeStruct((B, Rm, LANES), warped_cloth_nchw.dtype),
        ),
        grid_spec=pltpu.PrefetchScalarGridSpec(
            num_scalar_prefetch=0,
            grid=(nsteps,),
            in_specs=[
                pl.BlockSpec(memory_space=pltpu.MemorySpace.SMEM),   # weights
                pl.BlockSpec(memory_space=pltpu.MemorySpace.SMEM),   # bias
                pl.BlockSpec((bt, c_in, R, LANES), lambda b: (b, 0, 0, 0)),
                pl.BlockSpec((bt, Rm, LANES), lambda b: (b, 0, 0)),
            ],
            out_specs=[
                pl.BlockSpec((bt, c_out, R, LANES), lambda b: (b, 0, 0, 0)),
                pl.BlockSpec((bt, Rm, LANES), lambda b: (b, 0, 0)),
            ],
        ),
        compiler_params=pltpu.CompilerParams(
            dimension_semantics=("parallel",)),
    )(w_flat, b_flat, person_p, cloth_p)

    # Free, contiguous reshapes back to NCHW.
    return p_r.reshape(B, c_out, H, W), m_c.reshape(B, C, H, W)


def _reference(person_nchw, warped_cloth_nchw, weight_oihw, bias):
    """Plain-JAX reference matching the PyTorch module."""
    y = lax.conv_general_dilated(
        person_nchw, weight_oihw, window_strides=(1, 1), padding="SAME",
        dimension_numbers=("NCHW", "OIHW", "NCHW"))
    p_rendered = y + bias.reshape(1, -1, 1, 1)
    m_composite = jax.nn.sigmoid(warped_cloth_nchw)
    return p_rendered, m_composite


if __name__ == "__main__":
    key = jax.random.PRNGKey(0)
    k_person, k_cloth, k_w, k_b = jax.random.split(key, 4)

    B, C, H, W = 2, 3, 16, 16  # TOM conv is Conv2d(3, 3, kernel_size=3, pad=1)
    person = jax.random.normal(k_person, (B, C, H, W), dtype=jnp.float32)
    warped_cloth = jax.random.normal(k_cloth, (B, C, H, W), dtype=jnp.float32)

    # Deterministic synthetic parameters, PyTorch OIHW layout.
    weight_oihw = 0.1 * jax.random.normal(k_w, (C, C, KH, KW), dtype=jnp.float32)
    bias = 0.1 * jax.random.normal(k_b, (C,), dtype=jnp.float32)

    p_rendered, m_composite = tom_forward(person, warped_cloth, weight_oihw, bias)
    jax.block_until_ready((p_rendered, m_composite))

    p_ref, m_ref = _reference(person, warped_cloth, weight_oihw, bias)
    assert jnp.allclose(p_rendered, p_ref, atol=1e-4, rtol=1e-4)
    assert jnp.allclose(m_composite, m_ref, atol=1e-5, rtol=1e-5)

    print("KERNEL_OK")
</pallas_src>

<mosaic_0001>
module attributes {stable_mosaic.version = 11 : i64} {
  func.func @_tom_kernel(%arg0: i32, %arg1: memref<81xf32, #tpu.memory_space<smem>>, %arg2: memref<3xf32, #tpu.memory_space<smem>>, %arg3: memref<1x3x2x128xf32, #tpu.memory_space<vmem>>, %arg4: memref<1x6x128xf32, #tpu.memory_space<vmem>>, %arg5: memref<1x3x2x128xf32, #tpu.memory_space<vmem>>, %arg6: memref<1x6x128xf32, #tpu.memory_space<vmem>>) attributes {dimension_semantics = [#tpu.dimension_semantics<parallel>], iteration_bounds = array<i64: 2>, scalar_prefetch = 0 : i64, scratch_operands = 0 : i64, tpu.core_type = #tpu.core_type<tc>, window_params = [{transform_indices = @transform_0, window_bounds = array<i64: 81>}, {transform_indices = @transform_1, window_bounds = array<i64: 3>}, {transform_indices = @transform_2, window_bounds = array<i64: 1, 3, 2, 128>}, {transform_indices = @transform_3, window_bounds = array<i64: 1, 6, 128>}, {transform_indices = @transform_4, window_bounds = array<i64: 1, 3, 2, 128>}, {transform_indices = @transform_5, window_bounds = array<i64: 1, 6, 128>}]} {
    %0 = tpu.iota {dimensions = array<i32: 0>} : vector<2x128xi32>
    %1 = tpu.iota {dimensions = array<i32: 1>} : vector<2x128xi32>
    %c128_i32 = arith.constant 128 : i32
    %2 = vector.broadcast %c128_i32 : i32 to vector<2x128xi32>
    %3 = arith.muli %0, %2 : vector<2x128xi32>
    %4 = arith.addi %3, %1 : vector<2x128xi32>
    %c4_i32 = arith.constant 4 : i32
    %5 = vector.broadcast %c4_i32 : i32 to vector<2x128xi32>
    %6 = arith.shrsi %4, %5 : vector<2x128xi32>
    %c15_i32 = arith.constant 15 : i32
    %7 = vector.broadcast %c15_i32 : i32 to vector<2x128xi32>
    %8 = arith.andi %4, %7 : vector<2x128xi32>
    %c-1_i32 = arith.constant -1 : i32
    %9 = vector.broadcast %c-1_i32 : i32 to vector<2x128xi32>
    %10 = arith.addi %6, %9 : vector<2x128xi32>
    %c0_i32 = arith.constant 0 : i32
    %11 = vector.broadcast %c0_i32 : i32 to vector<2x128xi32>
    %12 = arith.cmpi sge, %10, %11 : vector<2x128xi32>
    %c-1_i32_0 = arith.constant -1 : i32
    %13 = vector.broadcast %c-1_i32_0 : i32 to vector<2x128xi32>
    %14 = arith.addi %6, %13 : vector<2x128xi32>
    %c16_i32 = arith.constant 16 : i32
    %15 = vector.broadcast %c16_i32 : i32 to vector<2x128xi32>
    %16 = arith.cmpi slt, %14, %15 : vector<2x128xi32>
    %17 = arith.andi %12, %16 : vector<2x128xi1>
    %c-1_i32_1 = arith.constant -1 : i32
    %18 = vector.broadcast %c-1_i32_1 : i32 to vector<2x128xi32>
    %19 = arith.addi %8, %18 : vector<2x128xi32>
    %c0_i32_2 = arith.constant 0 : i32
    %20 = vector.broadcast %c0_i32_2 : i32 to vector<2x128xi32>
    %21 = arith.cmpi sge, %19, %20 : vector<2x128xi32>
    %22 = arith.andi %17, %21 : vector<2x128xi1>
    %c-1_i32_3 = arith.constant -1 : i32
    %23 = vector.broadcast %c-1_i32_3 : i32 to vector<2x128xi32>
    %24 = arith.addi %8, %23 : vector<2x128xi32>
    %c16_i32_4 = arith.constant 16 : i32
    %25 = vector.broadcast %c16_i32_4 : i32 to vector<2x128xi32>
    %26 = arith.cmpi slt, %24, %25 : vector<2x128xi32>
    %27 = arith.andi %22, %26 : vector<2x128xi1>
    %c111_i32 = arith.constant 111 : i32
    %28 = vector.broadcast %c111_i32 : i32 to vector<2x128xi32>
    %29 = arith.addi %1, %28 : vector<2x128xi32>
    %c128_i32_5 = arith.constant 128 : i32
    %30 = vector.broadcast %c128_i32_5 : i32 to vector<2x128xi32>
    %31 = arith.cmpi slt, %29, %30 : vector<2x128xi32>
    %c-1_i32_6 = arith.constant -1 : i32
    %32 = vector.broadcast %c-1_i32_6 : i32 to vector<2x128xi32>
    %33 = arith.addi %6, %32 : vector<2x128xi32>
    %c0_i32_7 = arith.constant 0 : i32
    %34 = vector.broadcast %c0_i32_7 : i32 to vector<2x128xi32>
    %35 = arith.cmpi sge, %33, %34 : vector<2x128xi32>
    %c-1_i32_8 = arith.constant -1 : i32
    %36 = vector.broadcast %c-1_i32_8 : i32 to vector<2x128xi32>
    %37 = arith.addi %6, %36 : vector<2x128xi32>
    %c16_i32_9 = arith.constant 16 : i32
    %38 = vector.broadcast %c16_i32_9 : i32 to vector<2x128xi32>
    %39 = arith.cmpi slt, %37, %38 : vector<2x128xi32>
    %40 = arith.andi %35, %39 : vector<2x128xi1>
    %c0_i32_10 = arith.constant 0 : i32
    %41 = vector.broadcast %c0_i32_10 : i32 to vector<2x128xi32>
    %42 = arith.addi %8, %41 : vector<2x128xi32>
    %c0_i32_11 = arith.constant 0 : i32
    %43 = vector.broadcast %c0_i32_11 : i32 to vector<2x128xi32>
    %44 = arith.cmpi sge, %42, %43 : vector<2x128xi32>
    %45 = arith.andi %40, %44 : vector<2x128xi1>
    %c0_i32_12 = arith.constant 0 : i32
    %46 = vector.broadcast %c0_i32_12 : i32 to vector<2x128xi32>
    %47 = arith.addi %8, %46 : vector<2x128xi32>
    %c16_i32_13 = arith.constant 16 : i32
    %48 = vector.broadcast %c16_i32_13 : i32 to vector<2x128xi32>
    %49 = arith.cmpi slt, %47, %48 : vector<2x128xi32>
    %50 = arith.andi %45, %49 : vector<2x128xi1>
    %c112_i32 = arith.constant 112 : i32
    %51 = vector.broadcast %c112_i32 : i32 to vector<2x128xi32>
    %52 = arith.addi %1, %51 : vector<2x128xi32>
    %c128_i32_14 = arith.constant 128 : i32
    %53 = vector.broadcast %c128_i32_14 : i32 to vector<2x128xi32>
    %54 = arith.cmpi slt, %52, %53 : vector<2x128xi32>
    %c-1_i32_15 = arith.constant -1 : i32
    %55 = vector.broadcast %c-1_i32_15 : i32 to vector<2x128xi32>
    %56 = arith.addi %6, %55 : vector<2x128xi32>
    %c0_i32_16 = arith.constant 0 : i32
    %57 = vector.broadcast %c0_i32_16 : i32 to vector<2x128xi32>
    %58 = arith.cmpi sge, %56, %57 : vector<2x128xi32>
    %c-1_i32_17 = arith.constant -1 : i32
    %59 = vector.broadcast %c-1_i32_17 : i32 to vector<2x128xi32>
    %60 = arith.addi %6, %59 : vector<2x128xi32>
    %c16_i32_18 = arith.constant 16 : i32
    %61 = vector.broadcast %c16_i32_18 : i32 to vector<2x128xi32>
    %62 = arith.cmpi slt, %60, %61 : vector<2x128xi32>
    %63 = arith.andi %58, %62 : vector<2x128xi1>
    %c1_i32 = arith.constant 1 : i32
    %64 = vector.broadcast %c1_i32 : i32 to vector<2x128xi32>
    %65 = arith.addi %8, %64 : vector<2x128xi32>
    %c0_i32_19 = arith.constant 0 : i32
    %66 = vector.broadcast %c0_i32_19 : i32 to vector<2x128xi32>
    %67 = arith.cmpi sge, %65, %66 : vector<2x128xi32>
    %68 = arith.andi %63, %67 : vector<2x128xi1>
    %c1_i32_20 = arith.constant 1 : i32
    %69 = vector.broadcast %c1_i32_20 : i32 to vector<2x128xi32>
    %70 = arith.addi %8, %69 : vector<2x128xi32>
    %c16_i32_21 = arith.constant 16 : i32
    %71 = vector.broadcast %c16_i32_21 : i32 to vector<2x128xi32>
    %72 = arith.cmpi slt, %70, %71 : vector<2x128xi32>
    %73 = arith.andi %68, %72 : vector<2x128xi1>
    %c113_i32 = arith.constant 113 : i32
    %74 = vector.broadcast %c113_i32 : i32 to vector<2x128xi32>
    %75 = arith.addi %1, %74 : vector<2x128xi32>
    %c128_i32_22 = arith.constant 128 : i32
    %76 = vector.broadcast %c128_i32_22 : i32 to vector<2x128xi32>
    %77 = arith.cmpi slt, %75, %76 : vector<2x128xi32>
    %c0_i32_23 = arith.constant 0 : i32
    %78 = vector.broadcast %c0_i32_23 : i32 to vector<2x128xi32>
    %79 = arith.addi %6, %78 : vector<2x128xi32>
    %c0_i32_24 = arith.constant 0 : i32
    %80 = vector.broadcast %c0_i32_24 : i32 to vector<2x128xi32>
    %81 = arith.cmpi sge, %79, %80 : vector<2x128xi32>
    %c0_i32_25 = arith.constant 0 : i32
    %82 = vector.broadcast %c0_i32_25 : i32 to vector<2x128xi32>
    %83 = arith.addi %6, %82 : vector<2x128xi32>
    %c16_i32_26 = arith.constant 16 : i32
    %84 = vector.broadcast %c16_i32_26 : i32 to vector<2x128xi32>
    %85 = arith.cmpi slt, %83, %84 : vector<2x128xi32>
    %86 = arith.andi %81, %85 : vector<2x128xi1>
    %c-1_i32_27 = arith.constant -1 : i32
    %87 = vector.broadcast %c-1_i32_27 : i32 to vector<2x128xi32>
    %88 = arith.addi %8, %87 : vector<2x128xi32>
    %c0_i32_28 = arith.constant 0 : i32
    %89 = vector.broadcast %c0_i32_28 : i32 to vector<2x128xi32>
    %90 = arith.cmpi sge, %88, %89 : vector<2x128xi32>
    %91 = arith.andi %86, %90 : vector<2x128xi1>
    %c-1_i32_29 = arith.constant -1 : i32
    %92 = vector.broadcast %c-1_i32_29 : i32 to vector<2x128xi32>
    %93 = arith.addi %8, %92 : vector<2x128xi32>
    %c16_i32_30 = arith.constant 16 : i32
    %94 = vector.broadcast %c16_i32_30 : i32 to vector<2x128xi32>
    %95 = arith.cmpi slt, %93, %94 : vector<2x128xi32>
    %96 = arith.andi %91, %95 : vector<2x128xi1>
    %c127_i32 = arith.constant 127 : i32
    %97 = vector.broadcast %c127_i32 : i32 to vector<2x128xi32>
    %98 = arith.addi %1, %97 : vector<2x128xi32>
    %c128_i32_31 = arith.constant 128 : i32
    %99 = vector.broadcast %c128_i32_31 : i32 to vector<2x128xi32>
    %100 = arith.cmpi slt, %98, %99 : vector<2x128xi32>
    %c0_i32_32 = arith.constant 0 : i32
    %101 = vector.broadcast %c0_i32_32 : i32 to vector<2x128xi32>
    %102 = arith.addi %6, %101 : vector<2x128xi32>
    %c0_i32_33 = arith.constant 0 : i32
    %103 = vector.broadcast %c0_i32_33 : i32 to vector<2x128xi32>
    %104 = arith.cmpi sge, %102, %103 : vector<2x128xi32>
    %c0_i32_34 = arith.constant 0 : i32
    %105 = vector.broadcast %c0_i32_34 : i32 to vector<2x128xi32>
    %106 = arith.addi %6, %105 : vector<2x128xi32>
    %c16_i32_35 = arith.constant 16 : i32
    %107 = vector.broadcast %c16_i32_35 : i32 to vector<2x128xi32>
    %108 = arith.cmpi slt, %106, %107 : vector<2x128xi32>
    %109 = arith.andi %104, %108 : vector<2x128xi1>
    %c1_i32_36 = arith.constant 1 : i32
    %110 = vector.broadcast %c1_i32_36 : i32 to vector<2x128xi32>
    %111 = arith.addi %8, %110 : vector<2x128xi32>
    %c0_i32_37 = arith.constant 0 : i32
    %112 = vector.broadcast %c0_i32_37 : i32 to vector<2x128xi32>
    %113 = arith.cmpi sge, %111, %112 : vector<2x128xi32>
    %114 = arith.andi %109, %113 : vector<2x128xi1>
    %c1_i32_38 = arith.constant 1 : i32
    %115 = vector.broadcast %c1_i32_38 : i32 to vector<2x128xi32>
    %116 = arith.addi %8, %115 : vector<2x128xi32>
    %c16_i32_39 = arith.constant 16 : i32
    %117 = vector.broadcast %c16_i32_39 : i32 to vector<2x128xi32>
    %118 = arith.cmpi slt, %116, %117 : vector<2x128xi32>
    %119 = arith.andi %114, %118 : vector<2x128xi1>
    %c1_i32_40 = arith.constant 1 : i32
    %120 = vector.broadcast %c1_i32_40 : i32 to vector<2x128xi32>
    %121 = arith.addi %1, %120 : vector<2x128xi32>
    %c128_i32_41 = arith.constant 128 : i32
    %122 = vector.broadcast %c128_i32_41 : i32 to vector<2x128xi32>
    %123 = arith.cmpi slt, %121, %122 : vector<2x128xi32>
    %c1_i32_42 = arith.constant 1 : i32
    %124 = vector.broadcast %c1_i32_42 : i32 to vector<2x128xi32>
    %125 = arith.addi %6, %124 : vector<2x128xi32>
    %c0_i32_43 = arith.constant 0 : i32
    %126 = vector.broadcast %c0_i32_43 : i32 to vector<2x128xi32>
    %127 = arith.cmpi sge, %125, %126 : vector<2x128xi32>
    %c1_i32_44 = arith.constant 1 : i32
    %128 = vector.broadcast %c1_i32_44 : i32 to vector<2x128xi32>
    %129 = arith.addi %6, %128 : vector<2x128xi32>
    %c16_i32_45 = arith.constant 16 : i32
    %130 = vector.broadcast %c16_i32_45 : i32 to vector<2x128xi32>
    %131 = arith.cmpi slt, %129, %130 : vector<2x128xi32>
    %132 = arith.andi %127, %131 : vector<2x128xi1>
    %c-1_i32_46 = arith.constant -1 : i32
    %133 = vector.broadcast %c-1_i32_46 : i32 to vector<2x128xi32>
    %134 = arith.addi %8, %133 : vector<2x128xi32>
    %c0_i32_47 = arith.constant 0 : i32
    %135 = vector.broadcast %c0_i32_47 : i32 to vector<2x128xi32>
    %136 = arith.cmpi sge, %134, %135 : vector<2x128xi32>
    %137 = arith.andi %132, %136 : vector<2x128xi1>
    %c-1_i32_48 = arith.constant -1 : i32
    %138 = vector.broadcast %c-1_i32_48 : i32 to vector<2x128xi32>
    %139 = arith.addi %8, %138 : vector<2x128xi32>
    %c16_i32_49 = arith.constant 16 : i32
    %140 = vector.broadcast %c16_i32_49 : i32 to vector<2x128xi32>
    %141 = arith.cmpi slt, %139, %140 : vector<2x128xi32>
    %142 = arith.andi %137, %141 : vector<2x128xi1>
    %c15_i32_50 = arith.constant 15 : i32
    %143 = vector.broadcast %c15_i32_50 : i32 to vector<2x128xi32>
    %144 = arith.addi %1, %143 : vector<2x128xi32>
    %c128_i32_51 = arith.constant 128 : i32
    %145 = vector.broadcast %c128_i32_51 : i32 to vector<2x128xi32>
    %146 = arith.cmpi slt, %144, %145 : vector<2x128xi32>
    %c1_i32_52 = arith.constant 1 : i32
    %147 = vector.broadcast %c1_i32_52 : i32 to vector<2x128xi32>
    %148 = arith.addi %6, %147 : vector<2x128xi32>
    %c0_i32_53 = arith.constant 0 : i32
    %149 = vector.broadcast %c0_i32_53 : i32 to vector<2x128xi32>
    %150 = arith.cmpi sge, %148, %149 : vector<2x128xi32>
    %c1_i32_54 = arith.constant 1 : i32
    %151 = vector.broadcast %c1_i32_54 : i32 to vector<2x128xi32>
    %152 = arith.addi %6, %151 : vector<2x128xi32>
    %c16_i32_55 = arith.constant 16 : i32
    %153 = vector.broadcast %c16_i32_55 : i32 to vector<2x128xi32>
    %154 = arith.cmpi slt, %152, %153 : vector<2x128xi32>
    %155 = arith.andi %150, %154 : vector<2x128xi1>
    %c0_i32_56 = arith.constant 0 : i32
    %156 = vector.broadcast %c0_i32_56 : i32 to vector<2x128xi32>
    %157 = arith.addi %8, %156 : vector<2x128xi32>
    %c0_i32_57 = arith.constant 0 : i32
    %158 = vector.broadcast %c0_i32_57 : i32 to vector<2x128xi32>
    %159 = arith.cmpi sge, %157, %158 : vector<2x128xi32>
    %160 = arith.andi %155, %159 : vector<2x128xi1>
    %c0_i32_58 = arith.constant 0 : i32
    %161 = vector.broadcast %c0_i32_58 : i32 to vector<2x128xi32>
    %162 = arith.addi %8, %161 : vector<2x128xi32>
    %c16_i32_59 = arith.constant 16 : i32
    %163 = vector.broadcast %c16_i32_59 : i32 to vector<2x128xi32>
    %164 = arith.cmpi slt, %162, %163 : vector<2x128xi32>
    %165 = arith.andi %160, %164 : vector<2x128xi1>
    %c16_i32_60 = arith.constant 16 : i32
    %166 = vector.broadcast %c16_i32_60 : i32 to vector<2x128xi32>
    %167 = arith.addi %1, %166 : vector<2x128xi32>
    %c128_i32_61 = arith.constant 128 : i32
    %168 = vector.broadcast %c128_i32_61 : i32 to vector<2x128xi32>
    %169 = arith.cmpi slt, %167, %168 : vector<2x128xi32>
    %c1_i32_62 = arith.constant 1 : i32
    %170 = vector.broadcast %c1_i32_62 : i32 to vector<2x128xi32>
    %171 = arith.addi %6, %170 : vector<2x128xi32>
    %c0_i32_63 = arith.constant 0 : i32
    %172 = vector.broadcast %c0_i32_63 : i32 to vector<2x128xi32>
    %173 = arith.cmpi sge, %171, %172 : vector<2x128xi32>
    %c1_i32_64 = arith.constant 1 : i32
    %174 = vector.broadcast %c1_i32_64 : i32 to vector<2x128xi32>
    %175 = arith.addi %6, %174 : vector<2x128xi32>
    %c16_i32_65 = arith.constant 16 : i32
    %176 = vector.broadcast %c16_i32_65 : i32 to vector<2x128xi32>
    %177 = arith.cmpi slt, %175, %176 : vector<2x128xi32>
    %178 = arith.andi %173, %177 : vector<2x128xi1>
    %c1_i32_66 = arith.constant 1 : i32
    %179 = vector.broadcast %c1_i32_66 : i32 to vector<2x128xi32>
    %180 = arith.addi %8, %179 : vector<2x128xi32>
    %c0_i32_67 = arith.constant 0 : i32
    %181 = vector.broadcast %c0_i32_67 : i32 to vector<2x128xi32>
    %182 = arith.cmpi sge, %180, %181 : vector<2x128xi32>
    %183 = arith.andi %178, %182 : vector<2x128xi1>
    %c1_i32_68 = arith.constant 1 : i32
    %184 = vector.broadcast %c1_i32_68 : i32 to vector<2x128xi32>
    %185 = arith.addi %8, %184 : vector<2x128xi32>
    %c16_i32_69 = arith.constant 16 : i32
    %186 = vector.broadcast %c16_i32_69 : i32 to vector<2x128xi32>
    %187 = arith.cmpi slt, %185, %186 : vector<2x128xi32>
    %188 = arith.andi %183, %187 : vector<2x128xi1>
    %c17_i32 = arith.constant 17 : i32
    %189 = vector.broadcast %c17_i32 : i32 to vector<2x128xi32>
    %190 = arith.addi %1, %189 : vector<2x128xi32>
    %c128_i32_70 = arith.constant 128 : i32
    %191 = vector.broadcast %c128_i32_70 : i32 to vector<2x128xi32>
    %192 = arith.cmpi slt, %190, %191 : vector<2x128xi32>
    %c0 = arith.constant 0 : index
    %c0_71 = arith.constant 0 : index
    %c0_72 = arith.constant 0 : index
    %c0_73 = arith.constant 0 : index
    %193 = vector.load %arg3[%c0, %c0_71, %c0_72, %c0_73] : memref<1x3x2x128xf32, #tpu.memory_space<vmem>>, vector<1x1x2x128xf32>
    %194 = vector.shape_cast %193 : vector<1x1x2x128xf32> to vector<2x128xf32>
    %c0_74 = arith.constant 0 : index
    %c1 = arith.constant 1 : index
    %c0_75 = arith.constant 0 : index
    %c0_76 = arith.constant 0 : index
    %195 = vector.load %arg3[%c0_74, %c1, %c0_75, %c0_76] : memref<1x3x2x128xf32, #tpu.memory_space<vmem>>, vector<1x1x2x128xf32>
    %196 = vector.shape_cast %195 : vector<1x1x2x128xf32> to vector<2x128xf32>
    %c0_77 = arith.constant 0 : index
    %c2 = arith.constant 2 : index
    %c0_78 = arith.constant 0 : index
    %c0_79 = arith.constant 0 : index
    %197 = vector.load %arg3[%c0_77, %c2, %c0_78, %c0_79] : memref<1x3x2x128xf32, #tpu.memory_space<vmem>>, vector<1x1x2x128xf32>
    %198 = vector.shape_cast %197 : vector<1x1x2x128xf32> to vector<2x128xf32>
    %c0_80 = arith.constant 0 : index
    %199 = memref.load %arg2[%c0_80] : memref<3xf32, #tpu.memory_space<smem>>
    %200 = vector.broadcast %199 : f32 to vector<2x128xf32>
    %c1_81 = arith.constant 1 : index
    %201 = memref.load %arg2[%c1_81] : memref<3xf32, #tpu.memory_space<smem>>
    %202 = vector.broadcast %201 : f32 to vector<2x128xf32>
    %c2_82 = arith.constant 2 : index
    %203 = memref.load %arg2[%c2_82] : memref<3xf32, #tpu.memory_space<smem>>
    %204 = vector.broadcast %203 : f32 to vector<2x128xf32>
    %c17_i32_83 = arith.constant 17 : i32
    %205 = tpu.dynamic_rotate %194 by %c17_i32_83 dim 1 : vector<2x128xf32>, i32 -> vector<2x128xf32>
    %206 = vector.extract_strided_slice %205 {offsets = [1, 0], sizes = [1, 128], strides = [1, 1]} : vector<2x128xf32> to vector<1x128xf32>
    %207 = vector.extract_strided_slice %205 {offsets = [0, 0], sizes = [1, 128], strides = [1, 1]} : vector<2x128xf32> to vector<1x128xf32>
    %208 = tpu.concatenate %206, %207 in 0 : vector<1x128xf32>, vector<1x128xf32> -> vector<2x128xf32>
    %209 = arith.select %31, %208, %205 : vector<2x128xi1>, vector<2x128xf32>
    %cst = arith.constant 0.000000e+00 : f32
    %210 = vector.broadcast %cst : f32 to vector<2x128xf32>
    %211 = arith.select %27, %209, %210 : vector<2x128xi1>, vector<2x128xf32>
    %c0_84 = arith.constant 0 : index
    %212 = memref.load %arg1[%c0_84] : memref<81xf32, #tpu.memory_space<smem>>
    %213 = vector.broadcast %212 : f32 to vector<2x128xf32>
    %214 = arith.mulf %211, %213 : vector<2x128xf32>
    %215 = arith.addf %200, %214 : vector<2x128xf32>
    %c1_85 = arith.constant 1 : index
    %216 = memref.load %arg1[%c1_85] : memref<81xf32, #tpu.memory_space<smem>>
    %217 = vector.broadcast %216 : f32 to vector<2x128xf32>
    %218 = arith.mulf %211, %217 : vector<2x128xf32>
    %219 = arith.addf %202, %218 : vector<2x128xf32>
    %c2_86 = arith.constant 2 : index
    %220 = memref.load %arg1[%c2_86] : memref<81xf32, #tpu.memory_space<smem>>
    %221 = vector.broadcast %220 : f32 to vector<2x128xf32>
    %222 = arith.mulf %211, %221 : vector<2x128xf32>
    %223 = arith.addf %204, %222 : vector<2x128xf32>
    %c17_i32_87 = arith.constant 17 : i32
    %224 = tpu.dynamic_rotate %196 by %c17_i32_87 dim 1 : vector<2x128xf32>, i32 -> vector<2x128xf32>
    %225 = vector.extract_strided_slice %224 {offsets = [1, 0], sizes = [1, 128], strides = [1, 1]} : vector<2x128xf32> to vector<1x128xf32>
    %226 = vector.extract_strided_slice %224 {offsets = [0, 0], sizes = [1, 128], strides = [1, 1]} : vector<2x128xf32> to vector<1x128xf32>
    %227 = tpu.concatenate %225, %226 in 0 : vector<1x128xf32>, vector<1x128xf32> -> vector<2x128xf32>
    %228 = arith.select %31, %227, %224 : vector<2x128xi1>, vector<2x128xf32>
    %cst_88 = arith.constant 0.000000e+00 : f32
    %229 = vector.broadcast %cst_88 : f32 to vector<2x128xf32>
    %230 = arith.select %27, %228, %229 : vector<2x128xi1>, vector<2x128xf32>
    %c3 = arith.constant 3 : index
    %231 = memref.load %arg1[%c3] : memref<81xf32, #tpu.memory_space<smem>>
    %232 = vector.broadcast %231 : f32 to vector<2x128xf32>
    %233 = arith.mulf %230, %232 : vector<2x128xf32>
    %234 = arith.addf %215, %233 : vector<2x128xf32>
    %c4 = arith.constant 4 : index
    %235 = memref.load %arg1[%c4] : memref<81xf32, #tpu.memory_space<smem>>
    %236 = vector.broadcast %235 : f32 to vector<2x128xf32>
    %237 = arith.mulf %230, %236 : vector<2x128xf32>
    %238 = arith.addf %219, %237 : vector<2x128xf32>
    %c5 = arith.constant 5 : index
    %239 = memref.load %arg1[%c5] : memref<81xf32, #tpu.memory_space<smem>>
    %240 = vector.broadcast %239 : f32 to vector<2x128xf32>
    %241 = arith.mulf %230, %240 : vector<2x128xf32>
    %242 = arith.addf %223, %241 : vector<2x128xf32>
    %c17_i32_89 = arith.constant 17 : i32
    %243 = tpu.dynamic_rotate %198 by %c17_i32_89 dim 1 : vector<2x128xf32>, i32 -> vector<2x128xf32>
    %244 = vector.extract_strided_slice %243 {offsets = [1, 0], sizes = [1, 128], strides = [1, 1]} : vector<2x128xf32> to vector<1x128xf32>
    %245 = vector.extract_strided_slice %243 {offsets = [0, 0], sizes = [1, 128], strides = [1, 1]} : vector<2x128xf32> to vector<1x128xf32>
    %246 = tpu.concatenate %244, %245 in 0 : vector<1x128xf32>, vector<1x128xf32> -> vector<2x128xf32>
    %247 = arith.select %31, %246, %243 : vector<2x128xi1>, vector<2x128xf32>
    %cst_90 = arith.constant 0.000000e+00 : f32
    %248 = vector.broadcast %cst_90 : f32 to vector<2x128xf32>
    %249 = arith.select %27, %247, %248 : vector<2x128xi1>, vector<2x128xf32>
    %c6 = arith.constant 6 : index
    %250 = memref.load %arg1[%c6] : memref<81xf32, #tpu.memory_space<smem>>
    %251 = vector.broadcast %250 : f32 to vector<2x128xf32>
    %252 = arith.mulf %249, %251 : vector<2x128xf32>
    %253 = arith.addf %234, %252 : vector<2x128xf32>
    %c7 = arith.constant 7 : index
    %254 = memref.load %arg1[%c7] : memref<81xf32, #tpu.memory_space<smem>>
    %255 = vector.broadcast %254 : f32 to vector<2x128xf32>
    %256 = arith.mulf %249, %255 : vector<2x128xf32>
    %257 = arith.addf %238, %256 : vector<2x128xf32>
    %c8 = arith.constant 8 : index
    %258 = memref.load %arg1[%c8] : memref<81xf32, #tpu.memory_space<smem>>
    %259 = vector.broadcast %258 : f32 to vector<2x128xf32>
    %260 = arith.mulf %249, %259 : vector<2x128xf32>
    %261 = arith.addf %242, %260 : vector<2x128xf32>
    %c16_i32_91 = arith.constant 16 : i32
    %262 = tpu.dynamic_rotate %194 by %c16_i32_91 dim 1 : vector<2x128xf32>, i32 -> vector<2x128xf32>
    %263 = vector.extract_strided_slice %262 {offsets = [1, 0], sizes = [1, 128], strides = [1, 1]} : vector<2x128xf32> to vector<1x128xf32>
    %264 = vector.extract_strided_slice %262 {offsets = [0, 0], sizes = [1, 128], strides = [1, 1]} : vector<2x128xf32> to vector<1x128xf32>
    %265 = tpu.concatenate %263, %264 in 0 : vector<1x128xf32>, vector<1x128xf32> -> vector<2x128xf32>
    %266 = arith.select %54, %265, %262 : vector<2x128xi1>, vector<2x128xf32>
    %cst_92 = arith.constant 0.000000e+00 : f32
    %267 = vector.broadcast %cst_92 : f32 to vector<2x128xf32>
    %268 = arith.select %50, %266, %267 : vector<2x128xi1>, vector<2x128xf32>
    %c9 = arith.constant 9 : index
    %269 = memref.load %arg1[%c9] : memref<81xf32, #tpu.memory_space<smem>>
    %270 = vector.broadcast %269 : f32 to vector<2x128xf32>
    %271 = arith.mulf %268, %270 : vector<2x128xf32>
    %272 = arith.addf %253, %271 : vector<2x128xf32>
    %c10 = arith.constant 10 : index
    %273 = memref.load %arg1[%c10] : memref<81xf32, #tpu.memory_space<smem>>
    %274 = vector.broadcast %273 : f32 to vector<2x128xf32>
    %275 = arith.mulf %268, %274 : vector<2x128xf32>
    %276 = arith.addf %257, %275 : vector<2x128xf32>
    %c11 = arith.constant 11 : index
    %277 = memref.load %arg1[%c11] : memref<81xf32, #tpu.memory_space<smem>>
    %278 = vector.broadcast %277 : f32 to vector<2x128xf32>
    %279 = arith.mulf %268, %278 : vector<2x128xf32>
    %280 = arith.addf %261, %279 : vector<2x128xf32>
    %c16_i32_93 = arith.constant 16 : i32
    %281 = tpu.dynamic_rotate %196 by %c16_i32_93 dim 1 : vector<2x128xf32>, i32 -> vector<2x128xf32>
    %282 = vector.extract_strided_slice %281 {offsets = [1, 0], sizes = [1, 128], strides = [1, 1]} : vector<2x128xf32> to vector<1x128xf32>
    %283 = vector.extract_strided_slice %281 {offsets = [0, 0], sizes = [1, 128], strides = [1, 1]} : vector<2x128xf32> to vector<1x128xf32>
    %284 = tpu.concatenate %282, %283 in 0 : vector<1x128xf32>, vector<1x128xf32> -> vector<2x128xf32>
    %285 = arith.select %54, %284, %281 : vector<2x128xi1>, vector<2x128xf32>
    %cst_94 = arith.constant 0.000000e+00 : f32
    %286 = vector.broadcast %cst_94 : f32 to vector<2x128xf32>
    %287 = arith.select %50, %285, %286 : vector<2x128xi1>, vector<2x128xf32>
    %c12 = arith.constant 12 : index
    %288 = memref.load %arg1[%c12] : memref<81xf32, #tpu.memory_space<smem>>
    %289 = vector.broadcast %288 : f32 to vector<2x128xf32>
    %290 = arith.mulf %287, %289 : vector<2x128xf32>
    %291 = arith.addf %272, %290 : vector<2x128xf32>
    %c13 = arith.constant 13 : index
    %292 = memref.load %arg1[%c13] : memref<81xf32, #tpu.memory_space<smem>>
    %293 = vector.broadcast %292 : f32 to vector<2x128xf32>
    %294 = arith.mulf %287, %293 : vector<2x128xf32>
    %295 = arith.addf %276, %294 : vector<2x128xf32>
    %c14 = arith.constant 14 : index
    %296 = memref.load %arg1[%c14] : memref<81xf32, #tpu.memory_space<smem>>
    %297 = vector.broadcast %296 : f32 to vector<2x128xf32>
    %298 = arith.mulf %287, %297 : vector<2x128xf32>
    %299 = arith.addf %280, %298 : vector<2x128xf32>
    %c16_i32_95 = arith.constant 16 : i32
    %300 = tpu.dynamic_rotate %198 by %c16_i32_95 dim 1 : vector<2x128xf32>, i32 -> vector<2x128xf32>
    %301 = vector.extract_strided_slice %300 {offsets = [1, 0], sizes = [1, 128], strides = [1, 1]} : vector<2x128xf32> to vector<1x128xf32>
    %302 = vector.extract_strided_slice %300 {offsets = [0, 0], sizes = [1, 128], strides = [1, 1]} : vector<2x128xf32> to vector<1x128xf32>
    %303 = tpu.concatenate %301, %302 in 0 : vector<1x128xf32>, vector<1x128xf32> -> vector<2x128xf32>
    %304 = arith.select %54, %303, %300 : vector<2x128xi1>, vector<2x128xf32>
    %cst_96 = arith.constant 0.000000e+00 : f32
    %305 = vector.broadcast %cst_96 : f32 to vector<2x128xf32>
    %306 = arith.select %50, %304, %305 : vector<2x128xi1>, vector<2x128xf32>
    %c15 = arith.constant 15 : index
    %307 = memref.load %arg1[%c15] : memref<81xf32, #tpu.memory_space<smem>>
    %308 = vector.broadcast %307 : f32 to vector<2x128xf32>
    %309 = arith.mulf %306, %308 : vector<2x128xf32>
    %310 = arith.addf %291, %309 : vector<2x128xf32>
    %c16 = arith.constant 16 : index
    %311 = memref.load %arg1[%c16] : memref<81xf32, #tpu.memory_space<smem>>
    %312 = vector.broadcast %311 : f32 to vector<2x128xf32>
    %313 = arith.mulf %306, %312 : vector<2x128xf32>
    %314 = arith.addf %295, %313 : vector<2x128xf32>
    %c17 = arith.constant 17 : index
    %315 = memref.load %arg1[%c17] : memref<81xf32, #tpu.memory_space<smem>>
    %316 = vector.broadcast %315 : f32 to vector<2x128xf32>
    %317 = arith.mulf %306, %316 : vector<2x128xf32>
    %318 = arith.addf %299, %317 : vector<2x128xf32>
    %c15_i32_97 = arith.constant 15 : i32
    %319 = tpu.dynamic_rotate %194 by %c15_i32_97 dim 1 : vector<2x128xf32>, i32 -> vector<2x128xf32>
    %320 = vector.extract_strided_slice %319 {offsets = [1, 0], sizes = [1, 128], strides = [1, 1]} : vector<2x128xf32> to vector<1x128xf32>
    %321 = vector.extract_strided_slice %319 {offsets = [0, 0], sizes = [1, 128], strides = [1, 1]} : vector<2x128xf32> to vector<1x128xf32>
    %322 = tpu.concatenate %320, %321 in 0 : vector<1x128xf32>, vector<1x128xf32> -> vector<2x128xf32>
    %323 = arith.select %77, %322, %319 : vector<2x128xi1>, vector<2x128xf32>
    %cst_98 = arith.constant 0.000000e+00 : f32
    %324 = vector.broadcast %cst_98 : f32 to vector<2x128xf32>
    %325 = arith.select %73, %323, %324 : vector<2x128xi1>, vector<2x128xf32>
    %c18 = arith.constant 18 : index
    %326 = memref.load %arg1[%c18] : memref<81xf32, #tpu.memory_space<smem>>
    %327 = vector.broadcast %326 : f32 to vector<2x128xf32>
    %328 = arith.mulf %325, %327 : vector<2x128xf32>
    %329 = arith.addf %310, %328 : vector<2x128xf32>
    %c19 = arith.constant 19 : index
    %330 = memref.load %arg1[%c19] : memref<81xf32, #tpu.memory_space<smem>>
    %331 = vector.broadcast %330 : f32 to vector<2x128xf32>
    %332 = arith.mulf %325, %331 : vector<2x128xf32>
    %333 = arith.addf %314, %332 : vector<2x128xf32>
    %c20 = arith.constant 20 : index
    %334 = memref.load %arg1[%c20] : memref<81xf32, #tpu.memory_space<smem>>
    %335 = vector.broadcast %334 : f32 to vector<2x128xf32>
    %336 = arith.mulf %325, %335 : vector<2x128xf32>
    %337 = arith.addf %318, %336 : vector<2x128xf32>
    %c15_i32_99 = arith.constant 15 : i32
    %338 = tpu.dynamic_rotate %196 by %c15_i32_99 dim 1 : vector<2x128xf32>, i32 -> vector<2x128xf32>
    %339 = vector.extract_strided_slice %338 {offsets = [1, 0], sizes = [1, 128], strides = [1, 1]} : vector<2x128xf32> to vector<1x128xf32>
    %340 = vector.extract_strided_slice %338 {offsets = [0, 0], sizes = [1, 128], strides = [1, 1]} : vector<2x128xf32> to vector<1x128xf32>
    %341 = tpu.concatenate %339, %340 in 0 : vector<1x128xf32>, vector<1x128xf32> -> vector<2x128xf32>
    %342 = arith.select %77, %341, %338 : vector<2x128xi1>, vector<2x128xf32>
    %cst_100 = arith.constant 0.000000e+00 : f32
    %343 = vector.broadcast %cst_100 : f32 to vector<2x128xf32>
    %344 = arith.select %73, %342, %343 : vector<2x128xi1>, vector<2x128xf32>
    %c21 = arith.constant 21 : index
    %345 = memref.load %arg1[%c21] : memref<81xf32, #tpu.memory_space<smem>>
    %346 = vector.broadcast %345 : f32 to vector<2x128xf32>
    %347 = arith.mulf %344, %346 : vector<2x128xf32>
    %348 = arith.addf %329, %347 : vector<2x128xf32>
    %c22 = arith.constant 22 : index
    %349 = memref.load %arg1[%c22] : memref<81xf32, #tpu.memory_space<smem>>
    %350 = vector.broadcast %349 : f32 to vector<2x128xf32>
    %351 = arith.mulf %344, %350 : vector<2x128xf32>
    %352 = arith.addf %333, %351 : vector<2x128xf32>
    %c23 = arith.constant 23 : index
    %353 = memref.load %arg1[%c23] : memref<81xf32, #tpu.memory_space<smem>>
    %354 = vector.broadcast %353 : f32 to vector<2x128xf32>
    %355 = arith.mulf %344, %354 : vector<2x128xf32>
    %356 = arith.addf %337, %355 : vector<2x128xf32>
    %c15_i32_101 = arith.constant 15 : i32
    %357 = tpu.dynamic_rotate %198 by %c15_i32_101 dim 1 : vector<2x128xf32>, i32 -> vector<2x128xf32>
    %358 = vector.extract_strided_slice %357 {offsets = [1, 0], sizes = [1, 128], strides = [1, 1]} : vector<2x128xf32> to vector<1x128xf32>
    %359 = vector.extract_strided_slice %357 {offsets = [0, 0], sizes = [1, 128], strides = [1, 1]} : vector<2x128xf32> to vector<1x128xf32>
    %360 = tpu.concatenate %358, %359 in 0 : vector<1x128xf32>, vector<1x128xf32> -> vector<2x128xf32>
    %361 = arith.select %77, %360, %357 : vector<2x128xi1>, vector<2x128xf32>
    %cst_102 = arith.constant 0.000000e+00 : f32
    %362 = vector.broadcast %cst_102 : f32 to vector<2x128xf32>
    %363 = arith.select %73, %361, %362 : vector<2x128xi1>, vector<2x128xf32>
    %c24 = arith.constant 24 : index
    %364 = memref.load %arg1[%c24] : memref<81xf32, #tpu.memory_space<smem>>
    %365 = vector.broadcast %364 : f32 to vector<2x128xf32>
    %366 = arith.mulf %363, %365 : vector<2x128xf32>
    %367 = arith.addf %348, %366 : vector<2x128xf32>
    %c25 = arith.constant 25 : index
    %368 = memref.load %arg1[%c25] : memref<81xf32, #tpu.memory_space<smem>>
    %369 = vector.broadcast %368 : f32 to vector<2x128xf32>
    %370 = arith.mulf %363, %369 : vector<2x128xf32>
    %371 = arith.addf %352, %370 : vector<2x128xf32>
    %c26 = arith.constant 26 : index
    %372 = memref.load %arg1[%c26] : memref<81xf32, #tpu.memory_space<smem>>
    %373 = vector.broadcast %372 : f32 to vector<2x128xf32>
    %374 = arith.mulf %363, %373 : vector<2x128xf32>
    %375 = arith.addf %356, %374 : vector<2x128xf32>
    %c1_i32_103 = arith.constant 1 : i32
    %376 = tpu.dynamic_rotate %194 by %c1_i32_103 dim 1 : vector<2x128xf32>, i32 -> vector<2x128xf32>
    %377 = vector.extract_strided_slice %376 {offsets = [1, 0], sizes = [1, 128], strides = [1, 1]} : vector<2x128xf32> to vector<1x128xf32>
    %378 = vector.extract_strided_slice %376 {offsets = [0, 0], sizes = [1, 128], strides = [1, 1]} : vector<2x128xf32> to vector<1x128xf32>
    %379 = tpu.concatenate %377, %378 in 0 : vector<1x128xf32>, vector<1x128xf32> -> vector<2x128xf32>
    %380 = arith.select %100, %379, %376 : vector<2x128xi1>, vector<2x128xf32>
    %cst_104 = arith.constant 0.000000e+00 : f32
    %381 = vector.broadcast %cst_104 : f32 to vector<2x128xf32>
    %382 = arith.select %96, %380, %381 : vector<2x128xi1>, vector<2x128xf32>
    %c27 = arith.constant 27 : index
    %383 = memref.load %arg1[%c27] : memref<81xf32, #tpu.memory_space<smem>>
    %384 = vector.broadcast %383 : f32 to vector<2x128xf32>
    %385 = arith.mulf %382, %384 : vector<2x128xf32>
    %386 = arith.addf %367, %385 : vector<2x128xf32>
    %c28 = arith.constant 28 : index
    %387 = memref.load %arg1[%c28] : memref<81xf32, #tpu.memory_space<smem>>
    %388 = vector.broadcast %387 : f32 to vector<2x128xf32>
    %389 = arith.mulf %382, %388 : vector<2x128xf32>
    %390 = arith.addf %371, %389 : vector<2x128xf32>
    %c29 = arith.constant 29 : index
    %391 = memref.load %arg1[%c29] : memref<81xf32, #tpu.memory_space<smem>>
    %392 = vector.broadcast %391 : f32 to vector<2x128xf32>
    %393 = arith.mulf %382, %392 : vector<2x128xf32>
    %394 = arith.addf %375, %393 : vector<2x128xf32>
    %c1_i32_105 = arith.constant 1 : i32
    %395 = tpu.dynamic_rotate %196 by %c1_i32_105 dim 1 : vector<2x128xf32>, i32 -> vector<2x128xf32>
    %396 = vector.extract_strided_slice %395 {offsets = [1, 0], sizes = [1, 128], strides = [1, 1]} : vector<2x128xf32> to vector<1x128xf32>
    %397 = vector.extract_strided_slice %395 {offsets = [0, 0], sizes = [1, 128], strides = [1, 1]} : vector<2x128xf32> to vector<1x128xf32>
    %398 = tpu.concatenate %396, %397 in 0 : vector<1x128xf32>, vector<1x128xf32> -> vector<2x128xf32>
    %399 = arith.select %100, %398, %395 : vector<2x128xi1>, vector<2x128xf32>
    %cst_106 = arith.constant 0.000000e+00 : f32
    %400 = vector.broadcast %cst_106 : f32 to vector<2x128xf32>
    %401 = arith.select %96, %399, %400 : vector<2x128xi1>, vector<2x128xf32>
    %c30 = arith.constant 30 : index
    %402 = memref.load %arg1[%c30] : memref<81xf32, #tpu.memory_space<smem>>
    %403 = vector.broadcast %402 : f32 to vector<2x128xf32>
    %404 = arith.mulf %401, %403 : vector<2x128xf32>
    %405 = arith.addf %386, %404 : vector<2x128xf32>
    %c31 = arith.constant 31 : index
    %406 = memref.load %arg1[%c31] : memref<81xf32, #tpu.memory_space<smem>>
    %407 = vector.broadcast %406 : f32 to vector<2x128xf32>
    %408 = arith.mulf %401, %407 : vector<2x128xf32>
    %409 = arith.addf %390, %408 : vector<2x128xf32>
    %c32 = arith.constant 32 : index
    %410 = memref.load %arg1[%c32] : memref<81xf32, #tpu.memory_space<smem>>
    %411 = vector.broadcast %410 : f32 to vector<2x128xf32>
    %412 = arith.mulf %401, %411 : vector<2x128xf32>
    %413 = arith.addf %394, %412 : vector<2x128xf32>
    %c1_i32_107 = arith.constant 1 : i32
    %414 = tpu.dynamic_rotate %198 by %c1_i32_107 dim 1 : vector<2x128xf32>, i32 -> vector<2x128xf32>
    %415 = vector.extract_strided_slice %414 {offsets = [1, 0], sizes = [1, 128], strides = [1, 1]} : vector<2x128xf32> to vector<1x128xf32>
    %416 = vector.extract_strided_slice %414 {offsets = [0, 0], sizes = [1, 128], strides = [1, 1]} : vector<2x128xf32> to vector<1x128xf32>
    %417 = tpu.concatenate %415, %416 in 0 : vector<1x128xf32>, vector<1x128xf32> -> vector<2x128xf32>
    %418 = arith.select %100, %417, %414 : vector<2x128xi1>, vector<2x128xf32>
    %cst_108 = arith.constant 0.000000e+00 : f32
    %419 = vector.broadcast %cst_108 : f32 to vector<2x128xf32>
    %420 = arith.select %96, %418, %419 : vector<2x128xi1>, vector<2x128xf32>
    %c33 = arith.constant 33 : index
    %421 = memref.load %arg1[%c33] : memref<81xf32, #tpu.memory_space<smem>>
    %422 = vector.broadcast %421 : f32 to vector<2x128xf32>
    %423 = arith.mulf %420, %422 : vector<2x128xf32>
    %424 = arith.addf %405, %423 : vector<2x128xf32>
    %c34 = arith.constant 34 : index
    %425 = memref.load %arg1[%c34] : memref<81xf32, #tpu.memory_space<smem>>
    %426 = vector.broadcast %425 : f32 to vector<2x128xf32>
    %427 = arith.mulf %420, %426 : vector<2x128xf32>
    %428 = arith.addf %409, %427 : vector<2x128xf32>
    %c35 = arith.constant 35 : index
    %429 = memref.load %arg1[%c35] : memref<81xf32, #tpu.memory_space<smem>>
    %430 = vector.broadcast %429 : f32 to vector<2x128xf32>
    %431 = arith.mulf %420, %430 : vector<2x128xf32>
    %432 = arith.addf %413, %431 : vector<2x128xf32>
    %c36 = arith.constant 36 : index
    %433 = memref.load %arg1[%c36] : memref<81xf32, #tpu.memory_space<smem>>
    %434 = vector.broadcast %433 : f32 to vector<2x128xf32>
    %435 = arith.mulf %194, %434 : vector<2x128xf32>
    %436 = arith.addf %424, %435 : vector<2x128xf32>
    %c37 = arith.constant 37 : index
    %437 = memref.load %arg1[%c37] : memref<81xf32, #tpu.memory_space<smem>>
    %438 = vector.broadcast %437 : f32 to vector<2x128xf32>
    %439 = arith.mulf %194, %438 : vector<2x128xf32>
    %440 = arith.addf %428, %439 : vector<2x128xf32>
    %c38 = arith.constant 38 : index
    %441 = memref.load %arg1[%c38] : memref<81xf32, #tpu.memory_space<smem>>
    %442 = vector.broadcast %441 : f32 to vector<2x128xf32>
    %443 = arith.mulf %194, %442 : vector<2x128xf32>
    %444 = arith.addf %432, %443 : vector<2x128xf32>
    %c39 = arith.constant 39 : index
    %445 = memref.load %arg1[%c39] : memref<81xf32, #tpu.memory_space<smem>>
    %446 = vector.broadcast %445 : f32 to vector<2x128xf32>
    %447 = arith.mulf %196, %446 : vector<2x128xf32>
    %448 = arith.addf %436, %447 : vector<2x128xf32>
    %c40 = arith.constant 40 : index
    %449 = memref.load %arg1[%c40] : memref<81xf32, #tpu.memory_space<smem>>
    %450 = vector.broadcast %449 : f32 to vector<2x128xf32>
    %451 = arith.mulf %196, %450 : vector<2x128xf32>
    %452 = arith.addf %440, %451 : vector<2x128xf32>
    %c41 = arith.constant 41 : index
    %453 = memref.load %arg1[%c41] : memref<81xf32, #tpu.memory_space<smem>>
    %454 = vector.broadcast %453 : f32 to vector<2x128xf32>
    %455 = arith.mulf %196, %454 : vector<2x128xf32>
    %456 = arith.addf %444, %455 : vector<2x128xf32>
    %c42 = arith.constant 42 : index
    %457 = memref.load %arg1[%c42] : memref<81xf32, #tpu.memory_space<smem>>
    %458 = vector.broadcast %457 : f32 to vector<2x128xf32>
    %459 = arith.mulf %198, %458 : vector<2x128xf32>
    %460 = arith.addf %448, %459 : vector<2x128xf32>
    %c43 = arith.constant 43 : index
    %461 = memref.load %arg1[%c43] : memref<81xf32, #tpu.memory_space<smem>>
    %462 = vector.broadcast %461 : f32 to vector<2x128xf32>
    %463 = arith.mulf %198, %462 : vector<2x128xf32>
    %464 = arith.addf %452, %463 : vector<2x128xf32>
    %c44 = arith.constant 44 : index
    %465 = memref.load %arg1[%c44] : memref<81xf32, #tpu.memory_space<smem>>
    %466 = vector.broadcast %465 : f32 to vector<2x128xf32>
    %467 = arith.mulf %198, %466 : vector<2x128xf32>
    %468 = arith.addf %456, %467 : vector<2x128xf32>
    %c127_i32_109 = arith.constant 127 : i32
    %469 = tpu.dynamic_rotate %194 by %c127_i32_109 dim 1 : vector<2x128xf32>, i32 -> vector<2x128xf32>
    %470 = vector.extract_strided_slice %469 {offsets = [1, 0], sizes = [1, 128], strides = [1, 1]} : vector<2x128xf32> to vector<1x128xf32>
    %471 = vector.extract_strided_slice %469 {offsets = [0, 0], sizes = [1, 128], strides = [1, 1]} : vector<2x128xf32> to vector<1x128xf32>
    %472 = tpu.concatenate %470, %471 in 0 : vector<1x128xf32>, vector<1x128xf32> -> vector<2x128xf32>
    %473 = arith.select %123, %469, %472 : vector<2x128xi1>, vector<2x128xf32>
    %cst_110 = arith.constant 0.000000e+00 : f32
    %474 = vector.broadcast %cst_110 : f32 to vector<2x128xf32>
    %475 = arith.select %119, %473, %474 : vector<2x128xi1>, vector<2x128xf32>
    %c45 = arith.constant 45 : index
    %476 = memref.load %arg1[%c45] : memref<81xf32, #tpu.memory_space<smem>>
    %477 = vector.broadcast %476 : f32 to vector<2x128xf32>
    %478 = arith.mulf %475, %477 : vector<2x128xf32>
    %479 = arith.addf %460, %478 : vector<2x128xf32>
    %c46 = arith.constant 46 : index
    %480 = memref.load %arg1[%c46] : memref<81xf32, #tpu.memory_space<smem>>
    %481 = vector.broadcast %480 : f32 to vector<2x128xf32>
    %482 = arith.mulf %475, %481 : vector<2x128xf32>
    %483 = arith.addf %464, %482 : vector<2x128xf32>
    %c47 = arith.constant 47 : index
    %484 = memref.load %arg1[%c47] : memref<81xf32, #tpu.memory_space<smem>>
    %485 = vector.broadcast %484 : f32 to vector<2x128xf32>
    %486 = arith.mulf %475, %485 : vector<2x128xf32>
    %487 = arith.addf %468, %486 : vector<2x128xf32>
    %c127_i32_111 = arith.constant 127 : i32
    %488 = tpu.dynamic_rotate %196 by %c127_i32_111 dim 1 : vector<2x128xf32>, i32 -> vector<2x128xf32>
    %489 = vector.extract_strided_slice %488 {offsets = [1, 0], sizes = [1, 128], strides = [1, 1]} : vector<2x128xf32> to vector<1x128xf32>
    %490 = vector.extract_strided_slice %488 {offsets = [0, 0], sizes = [1, 128], strides = [1, 1]} : vector<2x128xf32> to vector<1x128xf32>
    %491 = tpu.concatenate %489, %490 in 0 : vector<1x128xf32>, vector<1x128xf32> -> vector<2x128xf32>
    %492 = arith.select %123, %488, %491 : vector<2x128xi1>, vector<2x128xf32>
    %cst_112 = arith.constant 0.000000e+00 : f32
    %493 = vector.broadcast %cst_112 : f32 to vector<2x128xf32>
    %494 = arith.select %119, %492, %493 : vector<2x128xi1>, vector<2x128xf32>
    %c48 = arith.constant 48 : index
    %495 = memref.load %arg1[%c48] : memref<81xf32, #tpu.memory_space<smem>>
    %496 = vector.broadcast %495 : f32 to vector<2x128xf32>
    %497 = arith.mulf %494, %496 : vector<2x128xf32>
    %498 = arith.addf %479, %497 : vector<2x128xf32>
    %c49 = arith.constant 49 : index
    %499 = memref.load %arg1[%c49] : memref<81xf32, #tpu.memory_space<smem>>
    %500 = vector.broadcast %499 : f32 to vector<2x128xf32>
    %501 = arith.mulf %494, %500 : vector<2x128xf32>
    %502 = arith.addf %483, %501 : vector<2x128xf32>
    %c50 = arith.constant 50 : index
    %503 = memref.load %arg1[%c50] : memref<81xf32, #tpu.memory_space<smem>>
    %504 = vector.broadcast %503 : f32 to vector<2x128xf32>
    %505 = arith.mulf %494, %504 : vector<2x128xf32>
    %506 = arith.addf %487, %505 : vector<2x128xf32>
    %c127_i32_113 = arith.constant 127 : i32
    %507 = tpu.dynamic_rotate %198 by %c127_i32_113 dim 1 : vector<2x128xf32>, i32 -> vector<2x128xf32>
    %508 = vector.extract_strided_slice %507 {offsets = [1, 0], sizes = [1, 128], strides = [1, 1]} : vector<2x128xf32> to vector<1x128xf32>
    %509 = vector.extract_strided_slice %507 {offsets = [0, 0], sizes = [1, 128], strides = [1, 1]} : vector<2x128xf32> to vector<1x128xf32>
    %510 = tpu.concatenate %508, %509 in 0 : vector<1x128xf32>, vector<1x128xf32> -> vector<2x128xf32>
    %511 = arith.select %123, %507, %510 : vector<2x128xi1>, vector<2x128xf32>
    %cst_114 = arith.constant 0.000000e+00 : f32
    %512 = vector.broadcast %cst_114 : f32 to vector<2x128xf32>
    %513 = arith.select %119, %511, %512 : vector<2x128xi1>, vector<2x128xf32>
    %c51 = arith.constant 51 : index
    %514 = memref.load %arg1[%c51] : memref<81xf32, #tpu.memory_space<smem>>
    %515 = vector.broadcast %514 : f32 to vector<2x128xf32>
    %516 = arith.mulf %513, %515 : vector<2x128xf32>
    %517 = arith.addf %498, %516 : vector<2x128xf32>
    %c52 = arith.constant 52 : index
    %518 = memref.load %arg1[%c52] : memref<81xf32, #tpu.memory_space<smem>>
    %519 = vector.broadcast %518 : f32 to vector<2x128xf32>
    %520 = arith.mulf %513, %519 : vector<2x128xf32>
    %521 = arith.addf %502, %520 : vector<2x128xf32>
    %c53 = arith.constant 53 : index
    %522 = memref.load %arg1[%c53] : memref<81xf32, #tpu.memory_space<smem>>
    %523 = vector.broadcast %522 : f32 to vector<2x128xf32>
    %524 = arith.mulf %513, %523 : vector<2x128xf32>
    %525 = arith.addf %506, %524 : vector<2x128xf32>
    %c113_i32_115 = arith.constant 113 : i32
    %526 = tpu.dynamic_rotate %194 by %c113_i32_115 dim 1 : vector<2x128xf32>, i32 -> vector<2x128xf32>
    %527 = vector.extract_strided_slice %526 {offsets = [1, 0], sizes = [1, 128], strides = [1, 1]} : vector<2x128xf32> to vector<1x128xf32>
    %528 = vector.extract_strided_slice %526 {offsets = [0, 0], sizes = [1, 128], strides = [1, 1]} : vector<2x128xf32> to vector<1x128xf32>
    %529 = tpu.concatenate %527, %528 in 0 : vector<1x128xf32>, vector<1x128xf32> -> vector<2x128xf32>
    %530 = arith.select %146, %526, %529 : vector<2x128xi1>, vector<2x128xf32>
    %cst_116 = arith.constant 0.000000e+00 : f32
    %531 = vector.broadcast %cst_116 : f32 to vector<2x128xf32>
    %532 = arith.select %142, %530, %531 : vector<2x128xi1>, vector<2x128xf32>
    %c54 = arith.constant 54 : index
    %533 = memref.load %arg1[%c54] : memref<81xf32, #tpu.memory_space<smem>>
    %534 = vector.broadcast %533 : f32 to vector<2x128xf32>
    %535 = arith.mulf %532, %534 : vector<2x128xf32>
    %536 = arith.addf %517, %535 : vector<2x128xf32>
    %c55 = arith.constant 55 : index
    %537 = memref.load %arg1[%c55] : memref<81xf32, #tpu.memory_space<smem>>
    %538 = vector.broadcast %537 : f32 to vector<2x128xf32>
    %539 = arith.mulf %532, %538 : vector<2x128xf32>
    %540 = arith.addf %521, %539 : vector<2x128xf32>
    %c56 = arith.constant 56 : index
    %541 = memref.load %arg1[%c56] : memref<81xf32, #tpu.memory_space<smem>>
    %542 = vector.broadcast %541 : f32 to vector<2x128xf32>
    %543 = arith.mulf %532, %542 : vector<2x128xf32>
    %544 = arith.addf %525, %543 : vector<2x128xf32>
    %c113_i32_117 = arith.constant 113 : i32
    %545 = tpu.dynamic_rotate %196 by %c113_i32_117 dim 1 : vector<2x128xf32>, i32 -> vector<2x128xf32>
    %546 = vector.extract_strided_slice %545 {offsets = [1, 0], sizes = [1, 128], strides = [1, 1]} : vector<2x128xf32> to vector<1x128xf32>
    %547 = vector.extract_strided_slice %545 {offsets = [0, 0], sizes = [1, 128], strides = [1, 1]} : vector<2x128xf32> to vector<1x128xf32>
    %548 = tpu.concatenate %546, %547 in 0 : vector<1x128xf32>, vector<1x128xf32> -> vector<2x128xf32>
    %549 = arith.select %146, %545, %548 : vector<2x128xi1>, vector<2x128xf32>
    %cst_118 = arith.constant 0.000000e+00 : f32
    %550 = vector.broadcast %cst_118 : f32 to vector<2x128xf32>
    %551 = arith.select %142, %549, %550 : vector<2x128xi1>, vector<2x128xf32>
    %c57 = arith.constant 57 : index
    %552 = memref.load %arg1[%c57] : memref<81xf32, #tpu.memory_space<smem>>
    %553 = vector.broadcast %552 : f32 to vector<2x128xf32>
    %554 = arith.mulf %551, %553 : vector<2x128xf32>
    %555 = arith.addf %536, %554 : vector<2x128xf32>
    %c58 = arith.constant 58 : index
    %556 = memref.load %arg1[%c58] : memref<81xf32, #tpu.memory_space<smem>>
    %557 = vector.broadcast %556 : f32 to vector<2x128xf32>
    %558 = arith.mulf %551, %557 : vector<2x128xf32>
    %559 = arith.addf %540, %558 : vector<2x128xf32>
    %c59 = arith.constant 59 : index
    %560 = memref.load %arg1[%c59] : memref<81xf32, #tpu.memory_space<smem>>
    %561 = vector.broadcast %560 : f32 to vector<2x128xf32>
    %562 = arith.mulf %551, %561 : vector<2x128xf32>
    %563 = arith.addf %544, %562 : vector<2x128xf32>
    %c113_i32_119 = arith.constant 113 : i32
    %564 = tpu.dynamic_rotate %198 by %c113_i32_119 dim 1 : vector<2x128xf32>, i32 -> vector<2x128xf32>
    %565 = vector.extract_strided_slice %564 {offsets = [1, 0], sizes = [1, 128], strides = [1, 1]} : vector<2x128xf32> to vector<1x128xf32>
    %566 = vector.extract_strided_slice %564 {offsets = [0, 0], sizes = [1, 128], strides = [1, 1]} : vector<2x128xf32> to vector<1x128xf32>
    %567 = tpu.concatenate %565, %566 in 0 : vector<1x128xf32>, vector<1x128xf32> -> vector<2x128xf32>
    %568 = arith.select %146, %564, %567 : vector<2x128xi1>, vector<2x128xf32>
    %cst_120 = arith.constant 0.000000e+00 : f32
    %569 = vector.broadcast %cst_120 : f32 to vector<2x128xf32>
    %570 = arith.select %142, %568, %569 : vector<2x128xi1>, vector<2x128xf32>
    %c60 = arith.constant 60 : index
    %571 = memref.load %arg1[%c60] : memref<81xf32, #tpu.memory_space<smem>>
    %572 = vector.broadcast %571 : f32 to vector<2x128xf32>
    %573 = arith.mulf %570, %572 : vector<2x128xf32>
    %574 = arith.addf %555, %573 : vector<2x128xf32>
    %c61 = arith.constant 61 : index
    %575 = memref.load %arg1[%c61] : memref<81xf32, #tpu.memory_space<smem>>
    %576 = vector.broadcast %575 : f32 to vector<2x128xf32>
    %577 = arith.mulf %570, %576 : vector<2x128xf32>
    %578 = arith.addf %559, %577 : vector<2x128xf32>
    %c62 = arith.constant 62 : index
    %579 = memref.load %arg1[%c62] : memref<81xf32, #tpu.memory_space<smem>>
    %580 = vector.broadcast %579 : f32 to vector<2x128xf32>
    %581 = arith.mulf %570, %580 : vector<2x128xf32>
    %582 = arith.addf %563, %581 : vector<2x128xf32>
    %c112_i32_121 = arith.constant 112 : i32
    %583 = tpu.dynamic_rotate %194 by %c112_i32_121 dim 1 : vector<2x128xf32>, i32 -> vector<2x128xf32>
    %584 = vector.extract_strided_slice %583 {offsets = [1, 0], sizes = [1, 128], strides = [1, 1]} : vector<2x128xf32> to vector<1x128xf32>
    %585 = vector.extract_strided_slice %583 {offsets = [0, 0], sizes = [1, 128], strides = [1, 1]} : vector<2x128xf32> to vector<1x128xf32>
    %586 = tpu.concatenate %584, %585 in 0 : vector<1x128xf32>, vector<1x128xf32> -> vector<2x128xf32>
    %587 = arith.select %169, %583, %586 : vector<2x128xi1>, vector<2x128xf32>
    %cst_122 = arith.constant 0.000000e+00 : f32
    %588 = vector.broadcast %cst_122 : f32 to vector<2x128xf32>
    %589 = arith.select %165, %587, %588 : vector<2x128xi1>, vector<2x128xf32>
    %c63 = arith.constant 63 : index
    %590 = memref.load %arg1[%c63] : memref<81xf32, #tpu.memory_space<smem>>
    %591 = vector.broadcast %590 : f32 to vector<2x128xf32>
    %592 = arith.mulf %589, %591 : vector<2x128xf32>
    %593 = arith.addf %574, %592 : vector<2x128xf32>
    %c64 = arith.constant 64 : index
    %594 = memref.load %arg1[%c64] : memref<81xf32, #tpu.memory_space<smem>>
    %595 = vector.broadcast %594 : f32 to vector<2x128xf32>
    %596 = arith.mulf %589, %595 : vector<2x128xf32>
    %597 = arith.addf %578, %596 : vector<2x128xf32>
    %c65 = arith.constant 65 : index
    %598 = memref.load %arg1[%c65] : memref<81xf32, #tpu.memory_space<smem>>
    %599 = vector.broadcast %598 : f32 to vector<2x128xf32>
    %600 = arith.mulf %589, %599 : vector<2x128xf32>
    %601 = arith.addf %582, %600 : vector<2x128xf32>
    %c112_i32_123 = arith.constant 112 : i32
    %602 = tpu.dynamic_rotate %196 by %c112_i32_123 dim 1 : vector<2x128xf32>, i32 -> vector<2x128xf32>
    %603 = vector.extract_strided_slice %602 {offsets = [1, 0], sizes = [1, 128], strides = [1, 1]} : vector<2x128xf32> to vector<1x128xf32>
    %604 = vector.extract_strided_slice %602 {offsets = [0, 0], sizes = [1, 128], strides = [1, 1]} : vector<2x128xf32> to vector<1x128xf32>
    %605 = tpu.concatenate %603, %604 in 0 : vector<1x128xf32>, vector<1x128xf32> -> vector<2x128xf32>
    %606 = arith.select %169, %602, %605 : vector<2x128xi1>, vector<2x128xf32>
    %cst_124 = arith.constant 0.000000e+00 : f32
    %607 = vector.broadcast %cst_124 : f32 to vector<2x128xf32>
    %608 = arith.select %165, %606, %607 : vector<2x128xi1>, vector<2x128xf32>
    %c66 = arith.constant 66 : index
    %609 = memref.load %arg1[%c66] : memref<81xf32, #tpu.memory_space<smem>>
    %610 = vector.broadcast %609 : f32 to vector<2x128xf32>
    %611 = arith.mulf %608, %610 : vector<2x128xf32>
    %612 = arith.addf %593, %611 : vector<2x128xf32>
    %c67 = arith.constant 67 : index
    %613 = memref.load %arg1[%c67] : memref<81xf32, #tpu.memory_space<smem>>
    %614 = vector.broadcast %613 : f32 to vector<2x128xf32>
    %615 = arith.mulf %608, %614 : vector<2x128xf32>
    %616 = arith.addf %597, %615 : vector<2x128xf32>
    %c68 = arith.constant 68 : index
    %617 = memref.load %arg1[%c68] : memref<81xf32, #tpu.memory_space<smem>>
    %618 = vector.broadcast %617 : f32 to vector<2x128xf32>
    %619 = arith.mulf %608, %618 : vector<2x128xf32>
    %620 = arith.addf %601, %619 : vector<2x128xf32>
    %c112_i32_125 = arith.constant 112 : i32
    %621 = tpu.dynamic_rotate %198 by %c112_i32_125 dim 1 : vector<2x128xf32>, i32 -> vector<2x128xf32>
    %622 = vector.extract_strided_slice %621 {offsets = [1, 0], sizes = [1, 128], strides = [1, 1]} : vector<2x128xf32> to vector<1x128xf32>
    %623 = vector.extract_strided_slice %621 {offsets = [0, 0], sizes = [1, 128], strides = [1, 1]} : vector<2x128xf32> to vector<1x128xf32>
    %624 = tpu.concatenate %622, %623 in 0 : vector<1x128xf32>, vector<1x128xf32> -> vector<2x128xf32>
    %625 = arith.select %169, %621, %624 : vector<2x128xi1>, vector<2x128xf32>
    %cst_126 = arith.constant 0.000000e+00 : f32
    %626 = vector.broadcast %cst_126 : f32 to vector<2x128xf32>
    %627 = arith.select %165, %625, %626 : vector<2x128xi1>, vector<2x128xf32>
    %c69 = arith.constant 69 : index
    %628 = memref.load %arg1[%c69] : memref<81xf32, #tpu.memory_space<smem>>
    %629 = vector.broadcast %628 : f32 to vector<2x128xf32>
    %630 = arith.mulf %627, %629 : vector<2x128xf32>
    %631 = arith.addf %612, %630 : vector<2x128xf32>
    %c70 = arith.constant 70 : index
    %632 = memref.load %arg1[%c70] : memref<81xf32, #tpu.memory_space<smem>>
    %633 = vector.broadcast %632 : f32 to vector<2x128xf32>
    %634 = arith.mulf %627, %633 : vector<2x128xf32>
    %635 = arith.addf %616, %634 : vector<2x128xf32>
    %c71 = arith.constant 71 : index
    %636 = memref.load %arg1[%c71] : memref<81xf32, #tpu.memory_space<smem>>
    %637 = vector.broadcast %636 : f32 to vector<2x128xf32>
    %638 = arith.mulf %627, %637 : vector<2x128xf32>
    %639 = arith.addf %620, %638 : vector<2x128xf32>
    %c111_i32_127 = arith.constant 111 : i32
    %640 = tpu.dynamic_rotate %194 by %c111_i32_127 dim 1 : vector<2x128xf32>, i32 -> vector<2x128xf32>
    %641 = vector.extract_strided_slice %640 {offsets = [1, 0], sizes = [1, 128], strides = [1, 1]} : vector<2x128xf32> to vector<1x128xf32>
    %642 = vector.extract_strided_slice %640 {offsets = [0, 0], sizes = [1, 128], strides = [1, 1]} : vector<2x128xf32> to vector<1x128xf32>
    %643 = tpu.concatenate %641, %642 in 0 : vector<1x128xf32>, vector<1x128xf32> -> vector<2x128xf32>
    %644 = arith.select %192, %640, %643 : vector<2x128xi1>, vector<2x128xf32>
    %cst_128 = arith.constant 0.000000e+00 : f32
    %645 = vector.broadcast %cst_128 : f32 to vector<2x128xf32>
    %646 = arith.select %188, %644, %645 : vector<2x128xi1>, vector<2x128xf32>
    %c72 = arith.constant 72 : index
    %647 = memref.load %arg1[%c72] : memref<81xf32, #tpu.memory_space<smem>>
    %648 = vector.broadcast %647 : f32 to vector<2x128xf32>
    %649 = arith.mulf %646, %648 : vector<2x128xf32>
    %650 = arith.addf %631, %649 : vector<2x128xf32>
    %c73 = arith.constant 73 : index
    %651 = memref.load %arg1[%c73] : memref<81xf32, #tpu.memory_space<smem>>
    %652 = vector.broadcast %651 : f32 to vector<2x128xf32>
    %653 = arith.mulf %646, %652 : vector<2x128xf32>
    %654 = arith.addf %635, %653 : vector<2x128xf32>
    %c74 = arith.constant 74 : index
    %655 = memref.load %arg1[%c74] : memref<81xf32, #tpu.memory_space<smem>>
    %656 = vector.broadcast %655 : f32 to vector<2x128xf32>
    %657 = arith.mulf %646, %656 : vector<2x128xf32>
    %658 = arith.addf %639, %657 : vector<2x128xf32>
    %c111_i32_129 = arith.constant 111 : i32
    %659 = tpu.dynamic_rotate %196 by %c111_i32_129 dim 1 : vector<2x128xf32>, i32 -> vector<2x128xf32>
    %660 = vector.extract_strided_slice %659 {offsets = [1, 0], sizes = [1, 128], strides = [1, 1]} : vector<2x128xf32> to vector<1x128xf32>
    %661 = vector.extract_strided_slice %659 {offsets = [0, 0], sizes = [1, 128], strides = [1, 1]} : vector<2x128xf32> to vector<1x128xf32>
    %662 = tpu.concatenate %660, %661 in 0 : vector<1x128xf32>, vector<1x128xf32> -> vector<2x128xf32>
    %663 = arith.select %192, %659, %662 : vector<2x128xi1>, vector<2x128xf32>
    %cst_130 = arith.constant 0.000000e+00 : f32
    %664 = vector.broadcast %cst_130 : f32 to vector<2x128xf32>
    %665 = arith.select %188, %663, %664 : vector<2x128xi1>, vector<2x128xf32>
    %c75 = arith.constant 75 : index
    %666 = memref.load %arg1[%c75] : memref<81xf32, #tpu.memory_space<smem>>
    %667 = vector.broadcast %666 : f32 to vector<2x128xf32>
    %668 = arith.mulf %665, %667 : vector<2x128xf32>
    %669 = arith.addf %650, %668 : vector<2x128xf32>
    %c76 = arith.constant 76 : index
    %670 = memref.load %arg1[%c76] : memref<81xf32, #tpu.memory_space<smem>>
    %671 = vector.broadcast %670 : f32 to vector<2x128xf32>
    %672 = arith.mulf %665, %671 : vector<2x128xf32>
    %673 = arith.addf %654, %672 : vector<2x128xf32>
    %c77 = arith.constant 77 : index
    %674 = memref.load %arg1[%c77] : memref<81xf32, #tpu.memory_space<smem>>
    %675 = vector.broadcast %674 : f32 to vector<2x128xf32>
    %676 = arith.mulf %665, %675 : vector<2x128xf32>
    %677 = arith.addf %658, %676 : vector<2x128xf32>
    %c111_i32_131 = arith.constant 111 : i32
    %678 = tpu.dynamic_rotate %198 by %c111_i32_131 dim 1 : vector<2x128xf32>, i32 -> vector<2x128xf32>
    %679 = vector.extract_strided_slice %678 {offsets = [1, 0], sizes = [1, 128], strides = [1, 1]} : vector<2x128xf32> to vector<1x128xf32>
    %680 = vector.extract_strided_slice %678 {offsets = [0, 0], sizes = [1, 128], strides = [1, 1]} : vector<2x128xf32> to vector<1x128xf32>
    %681 = tpu.concatenate %679, %680 in 0 : vector<1x128xf32>, vector<1x128xf32> -> vector<2x128xf32>
    %682 = arith.select %192, %678, %681 : vector<2x128xi1>, vector<2x128xf32>
    %cst_132 = arith.constant 0.000000e+00 : f32
    %683 = vector.broadcast %cst_132 : f32 to vector<2x128xf32>
    %684 = arith.select %188, %682, %683 : vector<2x128xi1>, vector<2x128xf32>
    %c78 = arith.constant 78 : index
    %685 = memref.load %arg1[%c78] : memref<81xf32, #tpu.memory_space<smem>>
    %686 = vector.broadcast %685 : f32 to vector<2x128xf32>
    %687 = arith.mulf %684, %686 : vector<2x128xf32>
    %688 = arith.addf %669, %687 : vector<2x128xf32>
    %c79 = arith.constant 79 : index
    %689 = memref.load %arg1[%c79] : memref<81xf32, #tpu.memory_space<smem>>
    %690 = vector.broadcast %689 : f32 to vector<2x128xf32>
    %691 = arith.mulf %684, %690 : vector<2x128xf32>
    %692 = arith.addf %673, %691 : vector<2x128xf32>
    %c80 = arith.constant 80 : index
    %693 = memref.load %arg1[%c80] : memref<81xf32, #tpu.memory_space<smem>>
    %694 = vector.broadcast %693 : f32 to vector<2x128xf32>
    %695 = arith.mulf %684, %694 : vector<2x128xf32>
    %696 = arith.addf %677, %695 : vector<2x128xf32>
    %c0_133 = arith.constant 0 : index
    %c0_134 = arith.constant 0 : index
    %c0_135 = arith.constant 0 : index
    %c0_136 = arith.constant 0 : index
    %697 = vector.load %arg5[%c0_133, %c0_134, %c0_135, %c0_136] : memref<1x3x2x128xf32, #tpu.memory_space<vmem>>, vector<1x1x2x128xf32>
    %698 = vector.shape_cast %697 : vector<1x1x2x128xf32> to vector<2x128xf32>
    %699 = vector.shape_cast %688 : vector<2x128xf32> to vector<1x1x2x128xf32>
    tpu.vector_store %arg5[%c0_133, %c0_134, %c0_135, %c0_136], %699 {strides = array<i32>} : memref<1x3x2x128xf32, #tpu.memory_space<vmem>>, vector<1x1x2x128xf32>,
    %c0_137 = arith.constant 0 : index
    %c1_138 = arith.constant 1 : index
    %c0_139 = arith.constant 0 : index
    %c0_140 = arith.constant 0 : index
    %700 = vector.load %arg5[%c0_137, %c1_138, %c0_139, %c0_140] : memref<1x3x2x128xf32, #tpu.memory_space<vmem>>, vector<1x1x2x128xf32>
    %701 = vector.shape_cast %700 : vector<1x1x2x128xf32> to vector<2x128xf32>
    %702 = vector.shape_cast %692 : vector<2x128xf32> to vector<1x1x2x128xf32>
    tpu.vector_store %arg5[%c0_137, %c1_138, %c0_139, %c0_140], %702 {strides = array<i32>} : memref<1x3x2x128xf32, #tpu.memory_space<vmem>>, vector<1x1x2x128xf32>,
    %c0_141 = arith.constant 0 : index
    %c2_142 = arith.constant 2 : index
    %c0_143 = arith.constant 0 : index
    %c0_144 = arith.constant 0 : index
    %703 = vector.load %arg5[%c0_141, %c2_142, %c0_143, %c0_144] : memref<1x3x2x128xf32, #tpu.memory_space<vmem>>, vector<1x1x2x128xf32>
    %704 = vector.shape_cast %703 : vector<1x1x2x128xf32> to vector<2x128xf32>
    %705 = vector.shape_cast %696 : vector<2x128xf32> to vector<1x1x2x128xf32>
    tpu.vector_store %arg5[%c0_141, %c2_142, %c0_143, %c0_144], %705 {strides = array<i32>} : memref<1x3x2x128xf32, #tpu.memory_space<vmem>>, vector<1x1x2x128xf32>,
    %c0_145 = arith.constant 0 : index
    %c0_146 = arith.constant 0 : index
    %c0_147 = arith.constant 0 : index
    %706 = vector.load %arg4[%c0_145, %c0_146, %c0_147] : memref<1x6x128xf32, #tpu.memory_space<vmem>>, vector<1x6x128xf32>
    %cst_148 = arith.constant 5.000000e-01 : f32
    %707 = vector.broadcast %cst_148 : f32 to vector<1x6x128xf32>
    %708 = arith.mulf %707, %706 : vector<1x6x128xf32>
    %709 = math.tanh %708 : vector<1x6x128xf32>
    %cst_149 = arith.constant 5.000000e-01 : f32
    %710 = vector.broadcast %cst_149 : f32 to vector<1x6x128xf32>
    %711 = arith.mulf %710, %709 : vector<1x6x128xf32>
    %cst_150 = arith.constant 5.000000e-01 : f32
    %712 = vector.broadcast %cst_150 : f32 to vector<1x6x128xf32>
    %713 = arith.addf %711, %712 : vector<1x6x128xf32>
    %c0_151 = arith.constant 0 : index
    %c0_152 = arith.constant 0 : index
    %c0_153 = arith.constant 0 : index
    %714 = vector.load %arg6[%c0_151, %c0_152, %c0_153] : memref<1x6x128xf32, #tpu.memory_space<vmem>>, vector<1x6x128xf32>
    tpu.vector_store %arg6[%c0_151, %c0_152, %c0_153], %713 {strides = array<i32>} : memref<1x6x128xf32, #tpu.memory_space<vmem>>, vector<1x6x128xf32>,
    return
  }
  func.func @transform_0(%arg0: i32) -> i32 {
    %c0_i32 = arith.constant 0 : i32
    %c0_i32_0 = arith.constant 0 : i32
    return %c0_i32 : i32
  }
  func.func @transform_1(%arg0: i32) -> i32 {
    %c0_i32 = arith.constant 0 : i32
    %c0_i32_0 = arith.constant 0 : i32
    return %c0_i32 : i32
  }
  func.func @transform_2(%arg0: i32) -> (i32, i32, i32, i32) {
    %c0_i32 = arith.constant 0 : i32
    %c0_i32_0 = arith.constant 0 : i32
    %c0_i32_1 = arith.constant 0 : i32
    %c0_i32_2 = arith.constant 0 : i32
    return %arg0, %c0_i32, %c0_i32_0, %c0_i32_1 : i32, i32, i32, i32
  }
  func.func @transform_3(%arg0: i32) -> (i32, i32, i32) {
    %c0_i32 = arith.constant 0 : i32
    %c0_i32_0 = arith.constant 0 : i32
    %c0_i32_1 = arith.constant 0 : i32
    return %arg0, %c0_i32, %c0_i32_0 : i32, i32, i32
  }
  func.func @transform_4(%arg0: i32) -> (i32, i32, i32, i32) {
    %c0_i32 = arith.constant 0 : i32
    %c0_i32_0 = arith.constant 0 : i32
    %c0_i32_1 = arith.constant 0 : i32
    %c0_i32_2 = arith.constant 0 : i32
    return %arg0, %c0_i32, %c0_i32_0, %c0_i32_1 : i32, i32, i32, i32
  }
  func.func @transform_5(%arg0: i32) -> (i32, i32, i32) {
    %c0_i32 = arith.constant 0 : i32
    %c0_i32_0 = arith.constant 0 : i32
    %c0_i32_1 = arith.constant 0 : i32
    return %arg0, %c0_i32, %c0_i32_0 : i32, i32, i32
  }
}

</mosaic_0001>

<llo_original>
// kernel: tpu_custom_call.1
$region0: #{tpu_custom_call.1}
  #allocation0 [shape = 'u32[]', space=smem, size = 0x4, offset = 0x4, fixed_abs, tag = 'smem constant byte address 0x4 - core index']
  #allocation1 [shape = 'u32[144,128]{1,0:T(1,128)}', space=vmem, size = 0x12000, scoped, tag = 'internal scratch']
  %s0 = inlined_call_operand.vmem [shape: f32[81], index: 0, kind: input, shape index: {}]
  %s1 = inlined_call_operand.vmem [shape: f32[3], index: 1, kind: input, shape index: {}]
  %s2 = inlined_call_operand.vmem [shape: f32[2,3,2,128], index: 2, kind: input, shape index: {}]
  %s3 = inlined_call_operand.vmem [shape: f32[2,6,128], index: 3, kind: input, shape index: {}]
  %s4 = inlined_call_operand.hbm [shape: f32[2,3,2,128], index: 4, kind: output, shape index: {0}]
  %s5 = inlined_call_operand.vmem [shape: f32[2,6,128], index: 5, kind: output, shape index: {1}]
  %6 = xla_tuple %s4, %s5
  %s7 = sld [smem:[#allocation0]]
  $region65: #{tpu_custom_call.1} parent=0
    _
  %s9 = ssub.s32 1, %s7
  %s10 = scalar_select 0, %s9, %s7
  $region1: #{tpu_custom_call.1} parent=0
    #allocation2 [shape = 'u8[512]{0}', space=smem, size = 0x200, scoped, tag = 'input window, operand 0, single buffered']
    #allocation3 [shape = 's32[2]{0}', space=sflag, size = 0x8, scoped, tag = 'scoped memory for tpu_custom_call.1']
    #allocation4 [shape = 's32[2]{0}', space=sflag, size = 0x8, scoped, tag = 'scoped memory for tpu_custom_call.1']
    #allocation5 [shape = 'u8[512]{0}', space=smem, size = 0x200, scoped, tag = 'input window, operand 1, single buffered']
    #allocation6 [shape = 's32[1]{0}', space=sflag, size = 0x4, scoped, tag = 'scoped memory for tpu_custom_call.1']
    #allocation7 [shape = 'u8[6144]{0}', space=vmem, size = 0x1800, scoped, tag = 'output window, operand 0']
    %11 = vsyncpa [#allocation4], 0
    %12 = vsyncpa [#allocation6], 0
    %13 = vsyncpa [#allocation3], 0
    %s14 = scalar_lea.sflag [#allocation3], 1
    %15 = vsyncpa %s14, 0
    loop: start=0, step=1, limit=4
    $region2: #{tpu_custom_call.1} parent=1 // loop_pre_header
      _
    $region3: #{tpu_custom_call.1} parent=1 // loop_header
      %s17 = sphi 0, %s21
      %p18 = scmp.ge.s32.totalorder %s17, 4
      %s25 = sphi 0, %s25
      %s27 = sphi 0, %s25
      %s28 = sphi 0, %s27
      %s42 = sphi 0, %s28
      %s46 = sphi 0, %s46
      %s48 = sphi 0, %s46
      %s49 = sphi 0, %s48
      %s63 = sphi 0, %s49
      %s69 = sphi 0, %s71
      %s72 = sphi 0, %s69
      %s73 = sphi 0, %s72
      %s89 = sphi 0, %s73
      %s95 = sphi 0, %s97
      %s98 = sphi 0, %s95
      %s99 = sphi 0, %s98
      %s115 = sphi 0, %s99
      %s121 = sphi 0, %s123
      %s124 = sphi 0, %s121
      %s125 = sphi 0, %s124
      %s141 = sphi 0, %s125
      %s147 = sphi 0, %s149
      %s150 = sphi 0, %s147
      %s151 = sphi 0, %s150
      %s167 = sphi 0, %s151
    $region4: #{tpu_custom_call.1} parent=1 // loop_header_branch
      %20 = sbr.rel (%p18) target = $region8
    $region5: #{tpu_custom_call.1} parent=1 // loop_body
      %s22 = ssub.s32 %s17, 1
      %s23 = ssub.s32 %s17, 2
      %s24 = sadd.s32 %s17, 1
      %s26 = sadd.s32 %s25, 1
      %p29 = scmp.eq.s32.totalorder %s17, 1
      %p30 = scmp.ne.s32.totalorder %s25, %s27
      %p31 = scmp.eq.s32.totalorder %s17, 0
      %p32 = por %p30, %p31
      %p33 = scmp.ne.s32.totalorder %s25, %s27
      %p34 = scmp.eq.s32.totalorder %s22, 1
      %p35 = por %p33, %p34
      %p36 = scmp.ne.s32.totalorder %s27, %s28
      %p37 = scmp.eq.s32.totalorder %s22, 0
      %p38 = por %p36, %p37
      %p39 = scmp.ne.s32.totalorder %s27, %s28
      %p40 = scmp.eq.s32.totalorder %s23, 1
      %p41 = por %p39, %p40
      %p43 = scmp.ne.s32.totalorder %s28, %s42
      %p44 = scmp.eq.s32.totalorder %s23, 0
      %p45 = por %p43, %p44
      %s47 = sadd.s32 %s46, 1
      %p50 = scmp.eq.s32.totalorder %s17, 1
      %p51 = scmp.ne.s32.totalorder %s46, %s48
      %p52 = scmp.eq.s32.totalorder %s17, 0
      %p53 = por %p51, %p52
      %p54 = scmp.ne.s32.totalorder %s46, %s48
      %p55 = scmp.eq.s32.totalorder %s22, 1
      %p56 = por %p54, %p55
      %p57 = scmp.ne.s32.totalorder %s48, %s49
      %p58 = scmp.eq.s32.totalorder %s22, 0
      %p59 = por %p57, %p58
      %p60 = scmp.ne.s32.totalorder %s48, %s49
      %p61 = scmp.eq.s32.totalorder %s23, 1
      %p62 = por %p60, %p61
      %p64 = scmp.ne.s32.totalorder %s49, %s63
      %p65 = scmp.eq.s32.totalorder %s23, 0
      %p66 = por %p64, %p65
      %s67 = ssub.s32 %s17, %s24
      %p68 = scmp.eq.s32.totalorder %s67, 0
      %s70 = sadd.s32 %s69, 1
      %s71 = scalar_select %p68, %s69, %s70
      %p74 = pneg %p68
      %p75 = scmp.eq.s32.totalorder %s17, 1
      %p76 = por %p74, %p75
      %p77 = scmp.ne.s32.totalorder %s69, %s72
      %p78 = scmp.eq.s32.totalorder %s17, 0
      %p79 = por %p77, %p78
      %p80 = scmp.ne.s32.totalorder %s69, %s72
      %p81 = scmp.eq.s32.totalorder %s22, 1
      %p82 = por %p80, %p81
      %p83 = scmp.ne.s32.totalorder %s72, %s73
      %p84 = scmp.eq.s32.totalorder %s22, 0
      %p85 = por %p83, %p84
      %p86 = scmp.ne.s32.totalorder %s72, %s73
      %p87 = scmp.eq.s32.totalorder %s23, 1
      %p88 = por %p86, %p87
      %p90 = scmp.ne.s32.totalorder %s73, %s89
      %p91 = scmp.eq.s32.totalorder %s23, 0
      %p92 = por %p90, %p91
      %s93 = ssub.s32 %s17, %s24
      %p94 = scmp.eq.s32.totalorder %s93, 0
      %s96 = sadd.s32 %s95, 1
      %s97 = scalar_select %p94, %s95, %s96
      %p100 = pneg %p94
      %p101 = scmp.eq.s32.totalorder %s17, 1
      %p102 = por %p100, %p101
      %p103 = scmp.ne.s32.totalorder %s95, %s98
      %p104 = scmp.eq.s32.totalorder %s17, 0
      %p105 = por %p103, %p104
      %p106 = scmp.ne.s32.totalorder %s95, %s98
      %p107 = scmp.eq.s32.totalorder %s22, 1
      %p108 = por %p106, %p107
      %p109 = scmp.ne.s32.totalorder %s98, %s99
      %p110 = scmp.eq.s32.totalorder %s22, 0
      %p111 = por %p109, %p110
      %p112 = scmp.ne.s32.totalorder %s98, %s99
      %p113 = scmp.eq.s32.totalorder %s23, 1
      %p114 = por %p112, %p113
      %p116 = scmp.ne.s32.totalorder %s99, %s115
      %p117 = scmp.eq.s32.totalorder %s23, 0
      %p118 = por %p116, %p117
      %s119 = ssub.s32 %s17, %s24
      %p120 = scmp.eq.s32.totalorder %s119, 0
      %s122 = sadd.s32 %s121, 1
      %s123 = scalar_select %p120, %s121, %s122
      %p126 = pneg %p120
      %p127 = scmp.eq.s32.totalorder %s17, 1
      %p128 = por %p126, %p127
      %p129 = scmp.ne.s32.totalorder %s121, %s124
      %p130 = scmp.eq.s32.totalorder %s17, 0
      %p131 = por %p129, %p130
      %p132 = scmp.ne.s32.totalorder %s121, %s124
      %p133 = scmp.eq.s32.totalorder %s22, 1
      %p134 = por %p132, %p133
      %p135 = scmp.ne.s32.totalorder %s124, %s125
      %p136 = scmp.eq.s32.totalorder %s22, 0
      %p137 = por %p135, %p136
      %p138 = scmp.ne.s32.totalorder %s124, %s125
      %p139 = scmp.eq.s32.totalorder %s23, 1
      %p140 = por %p138, %p139
      %p142 = scmp.ne.s32.totalorder %s125, %s141
      %p143 = scmp.eq.s32.totalorder %s23, 0
      %p144 = por %p142, %p143
      %s145 = ssub.s32 %s17, %s24
      %p146 = scmp.eq.s32.totalorder %s145, 0
      %s148 = sadd.s32 %s147, 1
      %s149 = scalar_select %p146, %s147, %s148
      %p152 = pneg %p146
      %p153 = scmp.eq.s32.totalorder %s17, 1
      %p154 = por %p152, %p153
      %p155 = scmp.ne.s32.totalorder %s147, %s150
      %p156 = scmp.eq.s32.totalorder %s17, 0
      %p157 = por %p155, %p156
      %p158 = scmp.ne.s32.totalorder %s147, %s150
      %p159 = scmp.eq.s32.totalorder %s22, 1
      %p160 = por %p158, %p159
      %p161 = scmp.ne.s32.totalorder %s150, %s151
      %p162 = scmp.eq.s32.totalorder %s22, 0
      %p163 = por %p161, %p162
      %p164 = scmp.ne.s32.totalorder %s150, %s151
      %p165 = scmp.eq.s32.totalorder %s23, 1
      %p166 = por %p164, %p165
      %p168 = scmp.ne.s32.totalorder %s151, %s167
      %p169 = scmp.eq.s32.totalorder %s23, 0
      %p170 = por %p168, %p169
      %p171 = scmp.le.s32.totalorder 1, %s17
      %p172 = scmp.lt.s32.totalorder %s17, 3
      %p173 = pnand %p171, %p172
      %p174 = pneg %p173
      // Predicated region
      $region9: #{tpu_custom_call.1} parent=5 // pred_check
        _
      $region10: #{tpu_custom_call.1} parent=5 // pred_check_branch
        %176 = sbr.rel (%p173) target = $region12
      $region11: #{tpu_custom_call.1} parent=5 // pred_region
        %s177 = ssub.s32 %s17, 1
        // Predicated region
        $region13: #{tpu_custom_call.1} parent=11 // pred_check
          %p178 = pneg %p38
        $region14: #{tpu_custom_call.1} parent=11 // pred_check_branch
          %180 = sbr.rel (%p178) target = $region16
        $region15: #{tpu_custom_call.1} parent=11 // pred_region
          %s182 = ssub.s32 16, 16
          %183 = vsyncadd [#allocation4], %s182
          %s185 = sshll.u32 %s0, 4
          %s186 = int_to_ptr.vmem [resolvable:$true] %s185
          %188 = dma.vmem_to_smem %s186, 16, [#allocation2], [#allocation4]
        $region16: #{tpu_custom_call.1} parent=11 // pred_fallthru
          _
        // Predicated region
        $region17: #{tpu_custom_call.1} parent=11 // pred_check
          %p189 = pneg %p59
        $region18: #{tpu_custom_call.1} parent=11 // pred_check_branch
          %191 = sbr.rel (%p189) target = $region20
        $region19: #{tpu_custom_call.1} parent=11 // pred_region
          %s193 = ssub.s32 16, 16
          %194 = vsyncadd [#allocation6], %s193
          %s196 = sshll.u32 %s1, 4
          %s197 = int_to_ptr.vmem [resolvable:$true] %s196
          %199 = dma.vmem_to_smem %s197, 16, [#allocation5], [#allocation6]
        $region20: #{tpu_custom_call.1} parent=11 // pred_fallthru
          _
      $region12: #{tpu_custom_call.1} parent=5 // pred_fallthru
        _
      %p200 = scmp.lt.s32.totalorder %s17, 2
      // Predicated region
      $region21: #{tpu_custom_call.1} parent=5 // pred_check
        %p201 = pneg %p200
      $region22: #{tpu_custom_call.1} parent=5 // pred_check_branch
        %203 = sbr.rel (%p201) target = $region24
      $region23: #{tpu_custom_call.1} parent=5 // pred_region
        // Predicated region
        $region25: #{tpu_custom_call.1} parent=23 // pred_check
          %p204 = pneg %p79
        $region26: #{tpu_custom_call.1} parent=23 // pred_check_branch
          %206 = sbr.rel (%p204) target = $region28
        $region27: #{tpu_custom_call.1} parent=23 // pred_region
          %p207 = scmp.lt.s32.totalorder %s17, 1
          %s208 = scalar_select %p207, %s17, 1
          %s209 = smul.addr %s208, 3
          %s210 = smul.addr %s209, 2
          %s211 = scalar_lea.vmem %s2, %s210
        $region28: #{tpu_custom_call.1} parent=23 // pred_fallthru
          _
        // Predicated region
        $region29: #{tpu_custom_call.1} parent=23 // pred_check
          %p212 = pneg %p105
        $region30: #{tpu_custom_call.1} parent=23 // pred_check_branch
          %214 = sbr.rel (%p212) target = $region32
        $region31: #{tpu_custom_call.1} parent=23 // pred_region
          %p215 = scmp.lt.s32.totalorder %s17, 1
          %s216 = scalar_select %p215, %s17, 1
          %s217 = smul.addr %s216, 8
          %s218 = scalar_lea.vmem %s3, %s217
        $region32: #{tpu_custom_call.1} parent=23 // pred_fallthru
          _
      $region24: #{tpu_custom_call.1} parent=5 // pred_fallthru
        _
      %p219 = scmp.le.s32.totalorder 1, %s17
      %p220 = scmp.lt.s32.totalorder %s17, 3
      %p221 = pnand %p219, %p220
      %p222 = pneg %p221
      // Predicated region
      $region33: #{tpu_custom_call.1} parent=5 // pred_check
        _
      $region34: #{tpu_custom_call.1} parent=5 // pred_check_branch
        %224 = sbr.rel (%p221) target = $region36
      $region35: #{tpu_custom_call.1} parent=5 // pred_region
        %s225 = ssub.s32 %s17, 1
        // Predicated region
        $region37: #{tpu_custom_call.1} parent=35 // pred_check
          %p226 = pneg %p38
        $region38: #{tpu_custom_call.1} parent=35 // pred_check_branch
          %228 = sbr.rel (%p226) target = $region40
        $region39: #{tpu_custom_call.1} parent=35 // pred_region
          %229 = dma.done [#allocation4], 16
        $region40: #{tpu_custom_call.1} parent=35 // pred_fallthru
          _
        // Predicated region
        $region41: #{tpu_custom_call.1} parent=35 // pred_check
          %p230 = pneg %p59
        $region42: #{tpu_custom_call.1} parent=35 // pred_check_branch
          %232 = sbr.rel (%p230) target = $region44
        $region43: #{tpu_custom_call.1} parent=35 // pred_region
          %233 = dma.done [#allocation6], 16
        $region44: #{tpu_custom_call.1} parent=35 // pred_fallthru
          _
        %234 = sfence
        %p235 = pneg %p38
        %p236 = pneg %p35
        %p237 = pneg %p59
        %p238 = pneg %p56
        %p239 = scmp.lt.s32.totalorder %s22, 1
        %s240 = scalar_select %p239, %s22, 1
        %s241 = smul.addr %s240, 3
        %s242 = smul.addr %s241, 2
        %s243 = scalar_lea.vmem %s2, %s242
        %p244 = pneg %p85
        %p245 = pneg %p82
        %p246 = scmp.lt.s32.totalorder %s22, 1
        %s247 = scalar_select %p246, %s22, 1
        %s248 = smul.addr %s247, 8
        %s249 = scalar_lea.vmem %s3, %s248
        %p250 = pneg %p111
        %p251 = pneg %p108
        %p252 = pneg %p137
        %p253 = pneg %p134
        %s254 = sand.u32 %s124, 1
        %s255 = scalar_lea.sflag [#allocation3], %s254
        %s256 = sand.u32 %s124, 1
        %s257 = smul.addr %s256, 6
        %s258 = scalar_lea.vmem [#allocation7], %s257
        %p259 = pneg %p163
        %p260 = pneg %p160
        %p261 = scmp.lt.s32.totalorder %s22, 1
        %s262 = scalar_select %p261, %s22, 1
        %s263 = smul.addr %s262, 8
        %s264 = scalar_lea.vmem %s5, %s263
        %p265 = scmp.lt.s32.totalorder %s22, 1
        %s266 = scalar_select %p265, %s22, 1
        %s267 = smul.addr %s266, 3
        %s268 = smul.addr %s267, 2
        %s269 = scalar_lea.vmem %s2, %s268
        %p270 = scmp.lt.s32.totalorder %s22, 1
        %s271 = scalar_select %p270, %s22, 1
        %s272 = smul.addr %s271, 8
        %s273 = scalar_lea.vmem %s3, %s272
        %p274 = scmp.lt.s32.totalorder %s22, 1
        %s275 = scalar_select %p274, %s22, 1
        %s276 = smul.addr %s275, 8
        %s277 = scalar_lea.vmem %s5, %s276
        %v278 = vlaneseq
        %v279 = vshrl.u32 %v278, 7
        %v280 = vlaneseq
        %v281 = vand.u32 %v280, 127
        %v282 = vmul.u32 %v279, 128
        %v283 = vadd.s32 %v282, %v281
        %v284 = vshra.s32 %v283, 4
        %v285 = vand.u32 %v283, 15
        %v286 = vadd.s32 %v284, 4294967295
        %vm287 = vcmp.ge.s32.totalorder %v286, 0
        %vm288 = vcmp.lt.s32.totalorder %v286, 16
        %vm289 = vmand %vm287, %vm288
        %v290 = vadd.s32 %v285, 4294967295
        %vm291 = vcmp.ge.s32.totalorder %v290, 0
        %vm292 = vmand %vm289, %vm291
        %vm293 = vcmp.lt.s32.totalorder %v290, 16
        %vm294 = vmand %vm292, %vm293
        %v295 = vadd.s32 %v281, 111
        %vm296 = vcmp.lt.s32.totalorder %v295, 128
        %vm297 = vcmp.ge.s32.totalorder %v285, 0
        %vm298 = vmand %vm289, %vm297
        %vm299 = vcmp.lt.s32.totalorder %v285, 16
        %vm300 = vmand %vm298, %vm299
        %v301 = vadd.s32 %v281, 112
        %vm302 = vcmp.lt.s32.totalorder %v301, 128
        %v303 = vadd.s32 %v285, 1
        %vm304 = vcmp.ge.s32.totalorder %v303, 0
        %vm305 = vmand %vm289, %vm304
        %vm306 = vcmp.lt.s32.totalorder %v303, 16
        %vm307 = vmand %vm305, %vm306
        %v308 = vadd.s32 %v281, 113
        %vm309 = vcmp.lt.s32.totalorder %v308, 128
        %vm310 = vcmp.ge.s32.totalorder %v284, 0
        %vm311 = vcmp.lt.s32.totalorder %v284, 16
        %vm312 = vmand %vm310, %vm311
        %vm313 = vmand %vm312, %vm291
        %vm314 = vmand %vm313, %vm293
        %v315 = vadd.s32 %v281, 127
        %vm316 = vcmp.lt.s32.totalorder %v315, 128
        %vm317 = vmand %vm312, %vm304
        %vm318 = vmand %vm317, %vm306
        %v319 = vadd.s32 %v281, 1
        %vm320 = vcmp.lt.s32.totalorder %v319, 128
        %v321 = vadd.s32 %v284, 1
        %vm322 = vcmp.ge.s32.totalorder %v321, 0
        %vm323 = vcmp.lt.s32.totalorder %v321, 16
        %vm324 = vmand %vm322, %vm323
        %vm325 = vmand %vm324, %vm291
        %vm326 = vmand %vm325, %vm293
        %v327 = vadd.s32 %v281, 15
        %vm328 = vcmp.lt.s32.totalorder %v327, 128
        %vm329 = vmand %vm324, %vm297
        %vm330 = vmand %vm329, %vm299
        %v331 = vadd.s32 %v281, 16
        %vm332 = vcmp.lt.s32.totalorder %v331, 128
        %vm333 = vmand %vm324, %vm304
        %vm334 = vmand %vm333, %vm306
        %v335 = vadd.s32 %v281, 17
        %vm336 = vcmp.lt.s32.totalorder %v335, 128
        %v337 = vld [vmem:[%s269] sm:$0x3]
        %s338 = scalar_lea.vmem %s269, 2
        %v339 = vld [vmem:[%s338] sm:$0x3]
        %s340 = scalar_lea.vmem %s269, 4
        %v341 = vld [vmem:[%s340] sm:$0x3]
        %s342 = sld [smem:[#allocation5]]
        %v343 = vstv %s342
        %s344 = sld [smem:[#allocation5 + $0x1]]
        %v345 = vstv %s344
        %s346 = sld [smem:[#allocation5 + $0x2]]
        %v347 = vstv %s346
        %348 = vrot.lane.b32.xlu0 %v337, 17
        %v349 = vpop.permute.xlu0 %348
        %v351 = vrot.slane %v349, 1
        %v353 = vrot.slane %v349, 7
        %vm355 = vcmask 1040384
        %v356 = vsel %vm355, %v351, %v353
        %v357 = vsel %vm296, %v356, %v349
        %v358 = vsel %vm294, %v357, 0.0
        %s359 = sld [smem:[#allocation2]]
        %v360 = vstv %s359
        %v361 = vmul.f32 %v358, %v360
        %v362 = vadd.f32 %v343, %v361
        %s363 = sld [smem:[#allocation2 + $0x1]]
        %v364 = vstv %s363
        %v365 = vmul.f32 %v358, %v364
        %v366 = vadd.f32 %v345, %v365
        %s367 = sld [smem:[#allocation2 + $0x2]]
        %v368 = vstv %s367
        %v369 = vmul.f32 %v358, %v368
        %v370 = vadd.f32 %v347, %v369
        %371 = vrot.lane.b32.xlu0 %v339, 17
        %v372 = vpop.permute.xlu0 %371
        %v374 = vrot.slane %v372, 1
        %v376 = vrot.slane %v372, 7
        %v378 = vsel %vm355, %v374, %v376
        %v379 = vsel %vm296, %v378, %v372
        %v380 = vsel %vm294, %v379, 0.0
        %s381 = sld [smem:[#allocation2 + $0x3]]
        %v382 = vstv %s381
        %v383 = vmul.f32 %v380, %v382
        %v384 = vadd.f32 %v362, %v383
        %s385 = sld [smem:[#allocation2 + $0x4]]
        %v386 = vstv %s385
        %v387 = vmul.f32 %v380, %v386
        %v388 = vadd.f32 %v366, %v387
        %s389 = sld [smem:[#allocation2 + $0x5]]
        %v390 = vstv %s389
        %v391 = vmul.f32 %v380, %v390
        %v392 = vadd.f32 %v370, %v391
        %393 = vrot.lane.b32.xlu0 %v341, 17
        %v394 = vpop.permute.xlu0 %393
        %v396 = vrot.slane %v394, 1
        %v398 = vrot.slane %v394, 7
        %v400 = vsel %vm355, %v396, %v398
        %v401 = vsel %vm296, %v400, %v394
        %v402 = vsel %vm294, %v401, 0.0
        %s403 = sld [smem:[#allocation2 + $0x6]]
        %v404 = vstv %s403
        %v405 = vmul.f32 %v402, %v404
        %v406 = vadd.f32 %v384, %v405
        %s407 = sld [smem:[#allocation2 + $0x7]]
        %v408 = vstv %s407
        %v409 = vmul.f32 %v402, %v408
        %v410 = vadd.f32 %v388, %v409
        %s411 = sld [smem:[#allocation2 + $0x8]]
        %v412 = vstv %s411
        %v413 = vmul.f32 %v402, %v412
        %v414 = vadd.f32 %v392, %v413
        %415 = vrot.lane.b32.xlu0 %v337, 16
        %v416 = vpop.permute.xlu0 %415
        %v418 = vrot.slane %v416, 1
        %v420 = vrot.slane %v416, 7
        %v422 = vsel %vm355, %v418, %v420
        %v423 = vsel %vm302, %v422, %v416
        %v424 = vsel %vm300, %v423, 0.0
        %s425 = sld [smem:[#allocation2 + $0x9]]
        %v426 = vstv %s425
        %v427 = vmul.f32 %v424, %v426
        %v428 = vadd.f32 %v406, %v427
        %s429 = sld [smem:[#allocation2 + $0xa]]
        %v430 = vstv %s429
        %v431 = vmul.f32 %v424, %v430
        %v432 = vadd.f32 %v410, %v431
        %s433 = sld [smem:[#allocation2 + $0xb]]
        %v434 = vstv %s433
        %v435 = vmul.f32 %v424, %v434
        %v436 = vadd.f32 %v414, %v435
        %437 = vrot.lane.b32.xlu0 %v339, 16
        %v438 = vpop.permute.xlu0 %437
        %v440 = vrot.slane %v438, 1
        %v442 = vrot.slane %v438, 7
        %v444 = vsel %vm355, %v440, %v442
        %v445 = vsel %vm302, %v444, %v438
        %v446 = vsel %vm300, %v445, 0.0
        %s447 = sld [smem:[#allocation2 + $0xc]]
        %v448 = vstv %s447
        %v449 = vmul.f32 %v446, %v448
        %v450 = vadd.f32 %v428, %v449
        %s451 = sld [smem:[#allocation2 + $0xd]]
        %v452 = vstv %s451
        %v453 = vmul.f32 %v446, %v452
        %v454 = vadd.f32 %v432, %v453
        %s455 = sld [smem:[#allocation2 + $0xe]]
        %v456 = vstv %s455
        %v457 = vmul.f32 %v446, %v456
        %v458 = vadd.f32 %v436, %v457
        %459 = vrot.lane.b32.xlu0 %v341, 16
        %v460 = vpop.permute.xlu0 %459
        %v462 = vrot.slane %v460, 1
        %v464 = vrot.slane %v460, 7
        %v466 = vsel %vm355, %v462, %v464
        %v467 = vsel %vm302, %v466, %v460
        %v468 = vsel %vm300, %v467, 0.0
        %s469 = sld [smem:[#allocation2 + $0xf]]
        %v470 = vstv %s469
        %v471 = vmul.f32 %v468, %v470
        %v472 = vadd.f32 %v450, %v471
        %s473 = sld [smem:[#allocation2 + $0x10]]
        %v474 = vstv %s473
        %v475 = vmul.f32 %v468, %v474
        %v476 = vadd.f32 %v454, %v475
        %s477 = sld [smem:[#allocation2 + $0x11]]
        %v478 = vstv %s477
        %v479 = vmul.f32 %v468, %v478
        %v480 = vadd.f32 %v458, %v479
        %481 = vrot.lane.b32.xlu0 %v337, 15
        %v482 = vpop.permute.xlu0 %481
        %v484 = vrot.slane %v482, 1
        %v486 = vrot.slane %v482, 7
        %v488 = vsel %vm355, %v484, %v486
        %v489 = vsel %vm309, %v488, %v482
        %v490 = vsel %vm307, %v489, 0.0
        %s491 = sld [smem:[#allocation2 + $0x12]]
        %v492 = vstv %s491
        %v493 = vmul.f32 %v490, %v492
        %v494 = vadd.f32 %v472, %v493
        %s495 = sld [smem:[#allocation2 + $0x13]]
        %v496 = vstv %s495
        %v497 = vmul.f32 %v490, %v496
        %v498 = vadd.f32 %v476, %v497
        %s499 = sld [smem:[#allocation2 + $0x14]]
        %v500 = vstv %s499
        %v501 = vmul.f32 %v490, %v500
        %v502 = vadd.f32 %v480, %v501
        %503 = vrot.lane.b32.xlu0 %v339, 15
        %v504 = vpop.permute.xlu0 %503
        %v506 = vrot.slane %v504, 1
        %v508 = vrot.slane %v504, 7
        %v510 = vsel %vm355, %v506, %v508
        %v511 = vsel %vm309, %v510, %v504
        %v512 = vsel %vm307, %v511, 0.0
        %s513 = sld [smem:[#allocation2 + $0x15]]
        %v514 = vstv %s513
        %v515 = vmul.f32 %v512, %v514
        %v516 = vadd.f32 %v494, %v515
        %s517 = sld [smem:[#allocation2 + $0x16]]
        %v518 = vstv %s517
        %v519 = vmul.f32 %v512, %v518
        %v520 = vadd.f32 %v498, %v519
        %s521 = sld [smem:[#allocation2 + $0x17]]
        %v522 = vstv %s521
        %v523 = vmul.f32 %v512, %v522
        %v524 = vadd.f32 %v502, %v523
        %525 = vrot.lane.b32.xlu0 %v341, 15
        %v526 = vpop.permute.xlu0 %525
        %v528 = vrot.slane %v526, 1
        %v530 = vrot.slane %v526, 7
        %v532 = vsel %vm355, %v528, %v530
        %v533 = vsel %vm309, %v532, %v526
        %v534 = vsel %vm307, %v533, 0.0
        %s535 = sld [smem:[#allocation2 + $0x18]]
        %v536 = vstv %s535
        %v537 = vmul.f32 %v534, %v536
        %v538 = vadd.f32 %v516, %v537
        %s539 = sld [smem:[#allocation2 + $0x19]]
        %v540 = vstv %s539
        %v541 = vmul.f32 %v534, %v540
        %v542 = vadd.f32 %v520, %v541
        %s543 = sld [smem:[#allocation2 + $0x1a]]
        %v544 = vstv %s543
        %v545 = vmul.f32 %v534, %v544
        %v546 = vadd.f32 %v524, %v545
        %547 = vrot.lane.b32.xlu0 %v337, 1
        %v548 = vpop.permute.xlu0 %547
        %v550 = vrot.slane %v548, 1
        %v552 = vrot.slane %v548, 7
        %v554 = vsel %vm355, %v550, %v552
        %v555 = vsel %vm316, %v554, %v548
        %v556 = vsel %vm314, %v555, 0.0
        %s557 = sld [smem:[#allocation2 + $0x1b]]
        %v558 = vstv %s557
        %v559 = vmul.f32 %v556, %v558
        %v560 = vadd.f32 %v538, %v559
        %s561 = sld [smem:[#allocation2 + $0x1c]]
        %v562 = vstv %s561
        %v563 = vmul.f32 %v556, %v562
        %v564 = vadd.f32 %v542, %v563
        %s565 = sld [smem:[#allocation2 + $0x1d]]
        %v566 = vstv %s565
        %v567 = vmul.f32 %v556, %v566
        %v568 = vadd.f32 %v546, %v567
        %569 = vrot.lane.b32.xlu0 %v339, 1
        %v570 = vpop.permute.xlu0 %569
        %v572 = vrot.slane %v570, 1
        %v574 = vrot.slane %v570, 7
        %v576 = vsel %vm355, %v572, %v574
        %v577 = vsel %vm316, %v576, %v570
        %v578 = vsel %vm314, %v577, 0.0
        %s579 = sld [smem:[#allocation2 + $0x1e]]
        %v580 = vstv %s579
        %v581 = vmul.f32 %v578, %v580
        %v582 = vadd.f32 %v560, %v581
        %s583 = sld [smem:[#allocation2 + $0x1f]]
        %v584 = vstv %s583
        %v585 = vmul.f32 %v578, %v584
        %v586 = vadd.f32 %v564, %v585
        %s587 = sld [smem:[#allocation2 + $0x20]]
        %v588 = vstv %s587
        %v589 = vmul.f32 %v578, %v588
        %v590 = vadd.f32 %v568, %v589
        %591 = vrot.lane.b32.xlu0 %v341, 1
        %v592 = vpop.permute.xlu0 %591
        %v594 = vrot.slane %v592, 1
        %v596 = vrot.slane %v592, 7
        %v598 = vsel %vm355, %v594, %v596
        %v599 = vsel %vm316, %v598, %v592
        %v600 = vsel %vm314, %v599, 0.0
        %s601 = sld [smem:[#allocation2 + $0x21]]
        %v602 = vstv %s601
        %v603 = vmul.f32 %v600, %v602
        %v604 = vadd.f32 %v582, %v603
        %s605 = sld [smem:[#allocation2 + $0x22]]
        %v606 = vstv %s605
        %v607 = vmul.f32 %v600, %v606
        %v608 = vadd.f32 %v586, %v607
        %s609 = sld [smem:[#allocation2 + $0x23]]
        %v610 = vstv %s609
        %v611 = vmul.f32 %v600, %v610
        %v612 = vadd.f32 %v590, %v611
        %s613 = sld [smem:[#allocation2 + $0x24]]
        %v614 = vstv %s613
        %v615 = vmul.f32 %v337, %v614
        %v616 = vadd.f32 %v604, %v615
        %s617 = sld [smem:[#allocation2 + $0x25]]
        %v618 = vstv %s617
        %v619 = vmul.f32 %v337, %v618
        %v620 = vadd.f32 %v608, %v619
        %s621 = sld [smem:[#allocation2 + $0x26]]
        %v622 = vstv %s621
        %v623 = vmul.f32 %v337, %v622
        %v624 = vadd.f32 %v612, %v623
        %s625 = sld [smem:[#allocation2 + $0x27]]
        %v626 = vstv %s625
        %v627 = vmul.f32 %v339, %v626
        %v628 = vadd.f32 %v616, %v627
        %s629 = sld [smem:[#allocation2 + $0x28]]
        %v630 = vstv %s629
        %v631 = vmul.f32 %v339, %v630
        %v632 = vadd.f32 %v620, %v631
        %s633 = sld [smem:[#allocation2 + $0x29]]
        %v634 = vstv %s633
        %v635 = vmul.f32 %v339, %v634
        %v636 = vadd.f32 %v624, %v635
        %s637 = sld [smem:[#allocation2 + $0x2a]]
        %v638 = vstv %s637
        %v639 = vmul.f32 %v341, %v638
        %v640 = vadd.f32 %v628, %v639
        %s641 = sld [smem:[#allocation2 + $0x2b]]
        %v642 = vstv %s641
        %v643 = vmul.f32 %v341, %v642
        %v644 = vadd.f32 %v632, %v643
        %s645 = sld [smem:[#allocation2 + $0x2c]]
        %v646 = vstv %s645
        %v647 = vmul.f32 %v341, %v646
        %v648 = vadd.f32 %v636, %v647
        %649 = vrot.lane.b32.xlu0 %v337, 127
        %v650 = vpop.permute.xlu0 %649
        %v652 = vrot.slane %v650, 1
        %v654 = vrot.slane %v650, 7
        %v656 = vsel %vm355, %v652, %v654
        %v657 = vsel %vm320, %v650, %v656
        %v658 = vsel %vm318, %v657, 0.0
        %s659 = sld [smem:[#allocation2 + $0x2d]]
        %v660 = vstv %s659
        %v661 = vmul.f32 %v658, %v660
        %v662 = vadd.f32 %v640, %v661
        %s663 = sld [smem:[#allocation2 + $0x2e]]
        %v664 = vstv %s663
        %v665 = vmul.f32 %v658, %v664
        %v666 = vadd.f32 %v644, %v665
        %s667 = sld [smem:[#allocation2 + $0x2f]]
        %v668 = vstv %s667
        %v669 = vmul.f32 %v658, %v668
        %v670 = vadd.f32 %v648, %v669
        %671 = vrot.lane.b32.xlu0 %v339, 127
        %v672 = vpop.permute.xlu0 %671
        %v674 = vrot.slane %v672, 1
        %v676 = vrot.slane %v672, 7
        %v678 = vsel %vm355, %v674, %v676
        %v679 = vsel %vm320, %v672, %v678
        %v680 = vsel %vm318, %v679, 0.0
        %s681 = sld [smem:[#allocation2 + $0x30]]
        %v682 = vstv %s681
        %v683 = vmul.f32 %v680, %v682
        %v684 = vadd.f32 %v662, %v683
        %s685 = sld [smem:[#allocation2 + $0x31]]
        %v686 = vstv %s685
        %v687 = vmul.f32 %v680, %v686
        %v688 = vadd.f32 %v666, %v687
        %s689 = sld [smem:[#allocation2 + $0x32]]
        %v690 = vstv %s689
        %v691 = vmul.f32 %v680, %v690
        %v692 = vadd.f32 %v670, %v691
        %693 = vrot.lane.b32.xlu0 %v341, 127
        %v694 = vpop.permute.xlu0 %693
        %v696 = vrot.slane %v694, 1
        %v698 = vrot.slane %v694, 7
        %v700 = vsel %vm355, %v696, %v698
        %v701 = vsel %vm320, %v694, %v700
        %v702 = vsel %vm318, %v701, 0.0
        %s703 = sld [smem:[#allocation2 + $0x33]]
        %v704 = vstv %s703
        %v705 = vmul.f32 %v702, %v704
        %v706 = vadd.f32 %v684, %v705
        %s707 = sld [smem:[#allocation2 + $0x34]]
        %v708 = vstv %s707
        %v709 = vmul.f32 %v702, %v708
        %v710 = vadd.f32 %v688, %v709
        %s711 = sld [smem:[#allocation2 + $0x35]]
        %v712 = vstv %s711
        %v713 = vmul.f32 %v702, %v712
        %v714 = vadd.f32 %v692, %v713
        %715 = vrot.lane.b32.xlu0 %v337, 113
        %v716 = vpop.permute.xlu0 %715
        %v718 = vrot.slane %v716, 1
        %v720 = vrot.slane %v716, 7
        %v722 = vsel %vm355, %v718, %v720
        %v723 = vsel %vm328, %v716, %v722
        %v724 = vsel %vm326, %v723, 0.0
        %s725 = sld [smem:[#allocation2 + $0x36]]
        %v726 = vstv %s725
        %v727 = vmul.f32 %v724, %v726
        %v728 = vadd.f32 %v706, %v727
        %s729 = sld [smem:[#allocation2 + $0x37]]
        %v730 = vstv %s729
        %v731 = vmul.f32 %v724, %v730
        %v732 = vadd.f32 %v710, %v731
        %s733 = sld [smem:[#allocation2 + $0x38]]
        %v734 = vstv %s733
        %v735 = vmul.f32 %v724, %v734
        %v736 = vadd.f32 %v714, %v735
        %737 = vrot.lane.b32.xlu0 %v339, 113
        %v738 = vpop.permute.xlu0 %737
        %v740 = vrot.slane %v738, 1
        %v742 = vrot.slane %v738, 7
        %v744 = vsel %vm355, %v740, %v742
        %v745 = vsel %vm328, %v738, %v744
        %v746 = vsel %vm326, %v745, 0.0
        %s747 = sld [smem:[#allocation2 + $0x39]]
        %v748 = vstv %s747
        %v749 = vmul.f32 %v746, %v748
        %v750 = vadd.f32 %v728, %v749
        %s751 = sld [smem:[#allocation2 + $0x3a]]
        %v752 = vstv %s751
        %v753 = vmul.f32 %v746, %v752
        %v754 = vadd.f32 %v732, %v753
        %s755 = sld [smem:[#allocation2 + $0x3b]]
        %v756 = vstv %s755
        %v757 = vmul.f32 %v746, %v756
        %v758 = vadd.f32 %v736, %v757
        %759 = vrot.lane.b32.xlu0 %v341, 113
        %v760 = vpop.permute.xlu0 %759
        %v762 = vrot.slane %v760, 1
        %v764 = vrot.slane %v760, 7
        %v766 = vsel %vm355, %v762, %v764
        %v767 = vsel %vm328, %v760, %v766
        %v768 = vsel %vm326, %v767, 0.0
        %s769 = sld [smem:[#allocation2 + $0x3c]]
        %v770 = vstv %s769
        %v771 = vmul.f32 %v768, %v770
        %v772 = vadd.f32 %v750, %v771
        %s773 = sld [smem:[#allocation2 + $0x3d]]
        %v774 = vstv %s773
        %v775 = vmul.f32 %v768, %v774
        %v776 = vadd.f32 %v754, %v775
        %s777 = sld [smem:[#allocation2 + $0x3e]]
        %v778 = vstv %s777
        %v779 = vmul.f32 %v768, %v778
        %v780 = vadd.f32 %v758, %v779
        %781 = vrot.lane.b32.xlu0 %v337, 112
        %v782 = vpop.permute.xlu0 %781
        %v784 = vrot.slane %v782, 1
        %v786 = vrot.slane %v782, 7
        %v788 = vsel %vm355, %v784, %v786
        %v789 = vsel %vm332, %v782, %v788
        %v790 = vsel %vm330, %v789, 0.0
        %s791 = sld [smem:[#allocation2 + $0x3f]]
        %v792 = vstv %s791
        %v793 = vmul.f32 %v790, %v792
        %v794 = vadd.f32 %v772, %v793
        %s795 = sld [smem:[#allocation2 + $0x40]]
        %v796 = vstv %s795
        %v797 = vmul.f32 %v790, %v796
        %v798 = vadd.f32 %v776, %v797
        %s799 = sld [smem:[#allocation2 + $0x41]]
        %v800 = vstv %s799
        %v801 = vmul.f32 %v790, %v800
        %v802 = vadd.f32 %v780, %v801
        %803 = vrot.lane.b32.xlu0 %v339, 112
        %v804 = vpop.permute.xlu0 %803
        %v806 = vrot.slane %v804, 1
        %v808 = vrot.slane %v804, 7
        %v810 = vsel %vm355, %v806, %v808
        %v811 = vsel %vm332, %v804, %v810
        %v812 = vsel %vm330, %v811, 0.0
        %s813 = sld [smem:[#allocation2 + $0x42]]
        %v814 = vstv %s813
        %v815 = vmul.f32 %v812, %v814
        %v816 = vadd.f32 %v794, %v815
        %s817 = sld [smem:[#allocation2 + $0x43]]
        %v818 = vstv %s817
        %v819 = vmul.f32 %v812, %v818
        %v820 = vadd.f32 %v798, %v819
        %s821 = sld [smem:[#allocation2 + $0x44]]
        %v822 = vstv %s821
        %v823 = vmul.f32 %v812, %v822
        %v824 = vadd.f32 %v802, %v823
        %825 = vrot.lane.b32.xlu0 %v341, 112
        %v826 = vpop.permute.xlu0 %825
        %v828 = vrot.slane %v826, 1
        %v830 = vrot.slane %v826, 7
        %v832 = vsel %vm355, %v828, %v830
        %v833 = vsel %vm332, %v826, %v832
        %v834 = vsel %vm330, %v833, 0.0
        %s835 = sld [smem:[#allocation2 + $0x45]]
        %v836 = vstv %s835
        %v837 = vmul.f32 %v834, %v836
        %v838 = vadd.f32 %v816, %v837
        %s839 = sld [smem:[#allocation2 + $0x46]]
        %v840 = vstv %s839
        %v841 = vmul.f32 %v834, %v840
        %v842 = vadd.f32 %v820, %v841
        %s843 = sld [smem:[#allocation2 + $0x47]]
        %v844 = vstv %s843
        %v845 = vmul.f32 %v834, %v844
        %v846 = vadd.f32 %v824, %v845
        %847 = vrot.lane.b32.xlu0 %v337, 111
        %v848 = vpop.permute.xlu0 %847
        %v850 = vrot.slane %v848, 1
        %v852 = vrot.slane %v848, 7
        %v854 = vsel %vm355, %v850, %v852
        %v855 = vsel %vm336, %v848, %v854
        %v856 = vsel %vm334, %v855, 0.0
        %s857 = sld [smem:[#allocation2 + $0x48]]
        %v858 = vstv %s857
        %v859 = vmul.f32 %v856, %v858
        %v860 = vadd.f32 %v838, %v859
        %s861 = sld [smem:[#allocation2 + $0x49]]
        %v862 = vstv %s861
        %v863 = vmul.f32 %v856, %v862
        %v864 = vadd.f32 %v842, %v863
        %s865 = sld [smem:[#allocation2 + $0x4a]]
        %v866 = vstv %s865
        %v867 = vmul.f32 %v856, %v866
        %v868 = vadd.f32 %v846, %v867
        %869 = vrot.lane.b32.xlu0 %v339, 111
        %v870 = vpop.permute.xlu0 %869
        %v872 = vrot.slane %v870, 1
        %v874 = vrot.slane %v870, 7
        %v876 = vsel %vm355, %v872, %v874
        %v877 = vsel %vm336, %v870, %v876
        %v878 = vsel %vm334, %v877, 0.0
        %s879 = sld [smem:[#allocation2 + $0x4b]]
        %v880 = vstv %s879
        %v881 = vmul.f32 %v878, %v880
        %v882 = vadd.f32 %v860, %v881
        %s883 = sld [smem:[#allocation2 + $0x4c]]
        %v884 = vstv %s883
        %v885 = vmul.f32 %v878, %v884
        %v886 = vadd.f32 %v864, %v885
        %s887 = sld [smem:[#allocation2 + $0x4d]]
        %v888 = vstv %s887
        %v889 = vmul.f32 %v878, %v888
        %v890 = vadd.f32 %v868, %v889
        %891 = vrot.lane.b32.xlu0 %v341, 111
        %v892 = vpop.permute.xlu0 %891
        %v894 = vrot.slane %v892, 1
        %v896 = vrot.slane %v892, 7
        %v898 = vsel %vm355, %v894, %v896
        %v899 = vsel %vm336, %v892, %v898
        %v900 = vsel %vm334, %v899, 0.0
        %s901 = sld [smem:[#allocation2 + $0x4e]]
        %v902 = vstv %s901
        %v903 = vmul.f32 %v900, %v902
        %v904 = vadd.f32 %v882, %v903
        %s905 = sld [smem:[#allocation2 + $0x4f]]
        %v906 = vstv %s905
        %v907 = vmul.f32 %v900, %v906
        %v908 = vadd.f32 %v886, %v907
        %s909 = sld [smem:[#allocation2 + $0x50]]
        %v910 = vstv %s909
        %v911 = vmul.f32 %v900, %v910
        %v912 = vadd.f32 %v890, %v911
        %913 = vst [vmem:[%s258] sm:$0x3] %v904
        %s914 = scalar_lea.vmem %s258, 2 [#allocation7]
        %915 = vst [vmem:[%s914] sm:$0x3] %v908
        %s916 = scalar_lea.vmem %s258, 4 [#allocation7]
        %917 = vst [vmem:[%s916] sm:$0x3] %v912
        %v918 = vld [vmem:[%s273] sm:$0x3f]
        %v919 = vmul.f32 %v918, 0.5
        %v920 = vtanh.pop %v919
        %v921 = vmul.f32 %v920, 0.5
        %v922 = vadd.f32 %v921, 0.5
        %923 = vst [vmem:[%s277] sm:$0x3f] %v922
        %s924 = sand.u32 %s124, 1
        %s925 = scalar_lea.sflag [#allocation3], %s924
        %s926 = sand.u32 %s124, 1
        %s927 = smul.addr %s926, 6
        %s928 = scalar_lea.vmem [#allocation7], %s927
        %p929 = scmp.lt.s32.totalorder %s22, 1
        %s930 = scalar_select %p929, %s22, 1
        %s931 = smul.addr %s930, 8
        %s932 = scalar_lea.vmem %s5, %s931
        // Predicated region
        $region45: #{tpu_custom_call.1} parent=35 // pred_check
          %p933 = pneg %p134
        $region46: #{tpu_custom_call.1} parent=35 // pred_check_branch
          %935 = sbr.rel (%p933) target = $region48
        $region47: #{tpu_custom_call.1} parent=35 // pred_region
          %s937 = ssub.s32 96, 96
          %938 = vsyncadd %s925, %s937
          %s939 = smul.addr %s22, 3
          %s940 = smul.addr %s939, 32
          %s941 = scalar_lea.hbm %s4, %s940
          %s942 = sshll.u32 %s928, 4
          %s943 = int_to_ptr.vmem [resolvable:$true] %s942
          %948 = dma.vmem_to_hbm [thread:$0]  %s943, 96, %s941, %s925, 32, 32, 2
        $region48: #{tpu_custom_call.1} parent=35 // pred_fallthru
          _
        // Predicated region
        $region49: #{tpu_custom_call.1} parent=35 // pred_check
          %p949 = pneg %p160
        $region50: #{tpu_custom_call.1} parent=35 // pred_check_branch
          %951 = sbr.rel (%p949) target = $region52
        $region51: #{tpu_custom_call.1} parent=35 // pred_region
          _
        $region52: #{tpu_custom_call.1} parent=35 // pred_fallthru
          _
      $region36: #{tpu_custom_call.1} parent=5 // pred_fallthru
        _
      %p952 = scmp.le.s32.totalorder 2, %s17
      // Predicated region
      $region53: #{tpu_custom_call.1} parent=5 // pred_check
        %p953 = pneg %p952
      $region54: #{tpu_custom_call.1} parent=5 // pred_check_branch
        %955 = sbr.rel (%p953) target = $region56
      $region55: #{tpu_custom_call.1} parent=5 // pred_region
        %s956 = ssub.s32 %s17, 2
        // Predicated region
        $region57: #{tpu_custom_call.1} parent=55 // pred_check
          %p957 = pneg %p140
        $region58: #{tpu_custom_call.1} parent=55 // pred_check_branch
          %959 = sbr.rel (%p957) target = $region60
        $region59: #{tpu_custom_call.1} parent=55 // pred_region
          %s960 = sand.u32 %s125, 1
          %s961 = scalar_lea.sflag [#allocation3], %s960
          %s962 = sand.u32 %s125, 1
          %s963 = smul.addr %s962, 6
          %s964 = scalar_lea.vmem [#allocation7], %s963
          %965 = dma.done %s961, 96
        $region60: #{tpu_custom_call.1} parent=55 // pred_fallthru
          _
        // Predicated region
        $region61: #{tpu_custom_call.1} parent=55 // pred_check
          %p966 = pneg %p166
        $region62: #{tpu_custom_call.1} parent=55 // pred_check_branch
          %968 = sbr.rel (%p966) target = $region64
        $region63: #{tpu_custom_call.1} parent=55 // pred_region
          %p969 = scmp.lt.s32.totalorder %s23, 1
          %s970 = scalar_select %p969, %s23, 1
          %s971 = smul.addr %s970, 8
          %s972 = scalar_lea.vmem %s5, %s971
        $region64: #{tpu_custom_call.1} parent=55 // pred_fallthru
          _
      $region56: #{tpu_custom_call.1} parent=5 // pred_fallthru
        _
    $region6: #{tpu_custom_call.1} parent=1 // loop_footer
      %s21 = sadd.s32 1, %s17
    $region7: #{tpu_custom_call.1} parent=1 // loop_footer_branch
      %16 = sbr.rel target = $region3
    $region8: #{tpu_custom_call.1} parent=1 // loop_exit
      _
    %973 = vsyncpa [#allocation3], 1
    %s974 = scalar_lea.sflag [#allocation3], 1
    %975 = vsyncpa %s974, 1
    %976 = vsyncpa [#allocation4], 1
    %s977 = scalar_lea.sflag [#allocation4], 1
    %978 = vsyncpa %s977, 1
    %979 = vsyncpa [#allocation6], 1

</llo_original>
